<compile_context>
chip_gen: v7x
topology: tpu7x:2x2x1
jax: 0.10.0
libtpu: 0.0.40
codegen_flags: <defaults>
</compile_context>

<pallas_src>
import functools

import jax
import jax.numpy as jnp
from jax.experimental import pallas as pl
from jax.experimental.pallas import tpu as pltpu


# --------------------------------------------------------------------------
# Kernel
# --------------------------------------------------------------------------
def make_fire_kernel(Bt, H, W, Cin, S, E1, E3, Hs):
    Cout = E1 + E3
    Mext = Bt * (Hs + 2) * W      # strip rows + 1-row halo top/bottom
    M = Bt * Hs * W               # output rows per grid step

    def kernel(x_ref, ws_ref, bs_ref, w1_ref, w3_ref, bc_ref, out_ref):
        h = pl.program_id(1)
        r0 = h * Hs                                   # first output row of strip

        # ---- gather strip rows + clamped 1-row halo from the resident plane
        top = x_ref[:, pl.ds(jnp.maximum(r0 - 1, 0), 1)]        # (Bt,1,W,Cin)
        mid = x_ref[:, pl.ds(r0, Hs)]                            # (Bt,Hs,W,Cin)
        bot = x_ref[:, pl.ds(jnp.minimum(r0 + Hs, H - 1), 1)]    # (Bt,1,W,Cin)
        x_ext = jnp.concatenate([top, mid, bot], axis=1)         # (Bt,Hs+2,W,Cin)

        # ---- squeeze 1x1 + ReLU (bf16 matmul, f32 accumulate) --------------
        sq = jnp.dot(x_ext.reshape(Mext, Cin), ws_ref[...],
                     preferred_element_type=jnp.float32)
        sq = jnp.maximum(sq + bs_ref[...], 0.0)
        sq = sq.reshape(Bt, Hs + 2, W, S)
        # zero halo rows that fall outside the image (the conv's zero padding)
        gidx = jax.lax.broadcasted_iota(jnp.int32, (1, Hs + 2, 1, 1), 1) + (r0 - 1)
        sq = jnp.where((gidx >= 0) & (gidx < H), sq, 0.0).astype(jnp.bfloat16)

        # ---- expand1x1 on the strip rows (K = S) ---------------------------
        sq_mid = jax.lax.slice_in_dim(sq, 1, Hs + 1, axis=1)      # (Bt,Hs,W,S)
        e1 = jnp.dot(sq_mid.reshape(M, S), w1_ref[...],
                     preferred_element_type=jnp.float32)          # (M,E1)

        # ---- expand3x3 as one K = 9S im2col matmul -------------------------
        zcol = jnp.zeros((Bt, Hs + 2, 1, S), jnp.bfloat16)
        sqp = jnp.concatenate([zcol, sq, zcol], axis=2)           # (Bt,Hs+2,W+2,S)
        parts = []
        for dy in range(3):
            rows = jax.lax.slice_in_dim(sqp, dy, dy + Hs, axis=1)  # (Bt,Hs,W+2,S)
            for dx in range(3):
                parts.append(jax.lax.slice_in_dim(rows, dx, dx + W, axis=2))
        patch = jnp.concatenate(parts, axis=-1)                   # (Bt,Hs,W,9S)
        e3 = jnp.dot(patch.reshape(M, 9 * S), w3_ref[...],
                     preferred_element_type=jnp.float32)          # (M,E3)

        # ---- fused bias + ReLU, single lane-dense store --------------------
        out = jnp.maximum(jnp.concatenate([e1, e3], axis=-1) + bc_ref[...], 0.0)
        out_ref[...] = out.reshape(Bt, Hs, W, Cout).astype(out_ref.dtype)

    return kernel


# --------------------------------------------------------------------------
# Parameter packing / tiling heuristics
# --------------------------------------------------------------------------
def _prepare_params(ws, bs, we1, be1, we3, be3):
    S = ws.shape[1]
    E1 = we1.shape[1]
    E3 = we3.shape[-1]
    ws_b = ws.astype(jnp.bfloat16)                       # (Cin, S)
    bs_f = bs.astype(jnp.float32).reshape(1, S)
    w1_b = we1.astype(jnp.bfloat16)                      # (S, E1)
    w3_b = we3.astype(jnp.bfloat16).reshape(9 * S, E3)   # (9S, E3), (dy,dx,s) order
    bc_f = jnp.concatenate([be1.reshape(1, E1), be3.reshape(1, E3)],
                           axis=-1).astype(jnp.float32)  # (1, E1+E3)
    return ws_b, bs_f, w1_b, w3_b, bc_f


def _vmem_limit_bytes():
    """Generation-aware scoped-VMEM limit (v5e/v6e: 128 MiB phys, v7x: 64 MiB)."""
    cap = 64 << 20
    try:
        info = pltpu.get_tpu_info()
        cap = int(getattr(info, "vmem_capacity_bytes", cap))
    except Exception:
        pass
    return max(16 << 20, min((cap * 3) // 4, 112 << 20))


def _estimate_vmem_bytes(Bt, H, Hs, W, Cin, S, E1, E3):
    Cout = E1 + E3
    x_block = 2 * Bt * H * W * Cin * 2            # double-buffered input plane
    out_block = 2 * Bt * Hs * W * Cout * 2        # double-buffered bf16 output strip
    weights = 2 * ((Cin * S + S * E1 + 9 * S * E3) * 2 + (S + Cout) * 4)
    ext_rows = Bt * (Hs + 2) * W
    strip_rows = Bt * Hs * W
    temps = (ext_rows * Cin * 2                   # x_ext (bf16)
             + ext_rows * S * 4                   # squeeze f32
             + ext_rows * S * 2 * 2               # squeeze bf16 + W-padded copy
             + strip_rows * 9 * S * 2             # im2col patch
             + strip_rows * Cout * 4 * 2          # e1|e3 f32 + fused f32
             + strip_rows * Cout * 2)             # bf16 store temp
    return x_block + out_block + weights + temps


def _auto_block_batch(B, H, W, target_rows=2048):
    bt = 1
    for d in range(1, B + 1):
        if B % d == 0 and d * H * W <= target_rows:
            bt = d
    return bt


def _choose_strip_height(B, Bt, H, W, Cin, S, E1, E3, budget):
    divs = sorted({d for d in range(1, H + 1) if H % d == 0}, reverse=True)
    fitting = [d for d in divs
               if _estimate_vmem_bytes(Bt, H, d, W, Cin, S, E1, E3) <= budget]
    if not fitting:
        return 1
    # Prefer >=2 total grid steps (pipelining / v7x dual-core) while keeping
    # at least ~256 matmul rows per step.
    for d in fitting:
        if (B // Bt) * (H // d) >= 2 and Bt * d * W >= 256:
            return d
    return fitting[0]


# --------------------------------------------------------------------------
# Wrappers
# --------------------------------------------------------------------------
def _fire_nhwc(x_nhwc, ws, bs, we1, be1, we3, be3, *, block_batch=None,
               out_dtype=jnp.bfloat16):
    B, H, W, Cin = x_nhwc.shape
    S = ws.shape[1]
    E1 = we1.shape[1]
    E3 = we3.shape[-1]
    Cout = E1 + E3

    if block_batch is None:
        Bt = _auto_block_batch(B, H, W)
    else:
        if B % block_batch != 0:
            raise ValueError(f"block_batch={block_batch} must divide batch {B}")
        Bt = block_batch

    vmem_limit = _vmem_limit_bytes()
    Hs = _choose_strip_height(B, Bt, H, W, Cin, S, E1, E3, vmem_limit // 2)

    ws_b, bs_f, w1_b, w3_b, bc_f = _prepare_params(ws, bs, we1, be1, we3, be3)
    x_b = x_nhwc.astype(jnp.bfloat16)

    flops = 2 * B * H * W * (Cin * S + S * E1 + 9 * S * E3)
    bytes_accessed = (B * H * W * Cin * 2
                      + B * H * W * Cout * jnp.dtype(out_dtype).itemsize
                      + (Cin * S + S * E1 + 9 * S * E3) * 2 + (S + Cout) * 4)

    kernel = make_fire_kernel(Bt, H, W, Cin, S, E1, E3, Hs)
    out = pl.pallas_call(
        kernel,
        out_shape=jax.ShapeDtypeStruct((B, H, W, Cout), out_dtype),
        grid=(B // Bt, H // Hs),
        in_specs=[
            # Full plane per batch block; index constant in h -> fetched once
            # per batch block and kept resident across the H strips.
            pl.BlockSpec((Bt, H, W, Cin), lambda b, h: (b, 0, 0, 0)),
            pl.BlockSpec((Cin, S), lambda b, h: (0, 0)),          # squeeze W
            pl.BlockSpec((1, S), lambda b, h: (0, 0)),            # squeeze b
            pl.BlockSpec((S, E1), lambda b, h: (0, 0)),           # expand1x1 W
            pl.BlockSpec((9 * S, E3), lambda b, h: (0, 0)),       # expand3x3 W
            pl.BlockSpec((1, Cout), lambda b, h: (0, 0)),         # fused bias
        ],
        out_specs=pl.BlockSpec((Bt, Hs, W, Cout), lambda b, h: (b, h, 0, 0)),
        compiler_params=pltpu.CompilerParams(
            dimension_semantics=("parallel", "parallel"),
            vmem_limit_bytes=vmem_limit),
        cost_estimate=pl.CostEstimate(flops=flops, transcendentals=0,
                                      bytes_accessed=bytes_accessed),
    )(x_b, ws_b, bs_f, w1_b, w3_b, bc_f)
    return out


# Chained-Fire entry point (stay NHWC / bf16 end-to-end, no transposes).
fire_forward_nhwc = jax.jit(_fire_nhwc,
                            static_argnames=("block_batch", "out_dtype"))


@functools.partial(jax.jit, static_argnames=("block_batch", "out_dtype"))
def fire_forward(x_nchw, ws, bs, we1, be1, we3, be3, *, block_batch=None,
                 out_dtype=jnp.bfloat16):
    """Fire forward (PyTorch layout). x_nchw: (B, Cin, H, W) -> (B, E1+E3, H, W)."""
    x_nhwc = jnp.transpose(x_nchw, (0, 2, 3, 1))
    out_nhwc = _fire_nhwc(x_nhwc, ws, bs, we1, be1, we3, be3,
                          block_batch=block_batch, out_dtype=out_dtype)
    return jnp.transpose(out_nhwc, (0, 3, 1, 2))


# --------------------------------------------------------------------------
# Synthetic params + pure-JAX reference
# --------------------------------------------------------------------------
def init_fire_params(key, inplanes, squeeze_planes, e1_planes, e3_planes):
    """Deterministic synthetic weights.

    PyTorch layouts would be:
      squeeze.weight   (S, Cin, 1, 1)  -> stored here as ws  (Cin, S)
      expand1x1.weight (E1, S, 1, 1)   -> stored here as we1 (S, E1)
      expand3x3.weight (E3, S, 3, 3)   -> stored here as we3 (3, 3, S, E3)
    Biases stored as (1, C).
    """
    k1, k2, k3, k4, k5, k6 = jax.random.split(key, 6)
    ws = jax.random.normal(k1, (inplanes, squeeze_planes), jnp.float32) * 0.2
    bs = jax.random.normal(k2, (1, squeeze_planes), jnp.float32) * 0.1
    we1 = jax.random.normal(k3, (squeeze_planes, e1_planes), jnp.float32) * 0.2
    be1 = jax.random.normal(k4, (1, e1_planes), jnp.float32) * 0.1
    we3 = jax.random.normal(k5, (3, 3, squeeze_planes, e3_planes),
                            jnp.float32) * 0.2
    be3 = jax.random.normal(k6, (1, e3_planes), jnp.float32) * 0.1
    return ws, bs, we1, be1, we3, be3


def fire_reference(x_nchw, ws, bs, we1, be1, we3, be3):
    """Pure-JAX f32 reference matching PyTorch Fire.forward semantics."""
    x = jnp.transpose(x_nchw, (0, 2, 3, 1)).astype(jnp.float32)  # NHWC
    B, H, W, _ = x.shape
    sq = jnp.maximum(jnp.einsum('bhwc,cs->bhws', x, ws) + bs[0], 0.0)
    e1 = jnp.maximum(jnp.einsum('bhws,se->bhwe', sq, we1) + be1[0], 0.0)
    sp = jnp.pad(sq, ((0, 0), (1, 1), (1, 1), (0, 0)))
    acc = jnp.zeros((B, H, W, we3.shape[-1]), jnp.float32) + be3[0]
    for dy in range(3):
        for dx in range(3):
            acc = acc + jnp.einsum('bhws,se->bhwe',
                                   sp[:, dy:dy + H, dx:dx + W, :],
                                   we3[dy, dx])
    e3 = jnp.maximum(acc, 0.0)
    out = jnp.concatenate([e1, e3], axis=-1)
    return jnp.transpose(out, (0, 3, 1, 2))  # back to NCHW


if __name__ == "__main__":
    key = jax.random.PRNGKey(0)
    kx, kp = jax.random.split(key)

    # Small shapes consistent with Fire(inplanes=4, squeeze=2, e1=4, e3=4).
    B, Cin, H, W = 2, 4, 16, 16
    S, E1, E3 = 2, 4, 4

    x = jax.random.normal(kx, (B, Cin, H, W), jnp.float32)
    params = init_fire_params(kp, Cin, S, E1, E3)
    ref = fire_reference(x, *params)

    # NCHW (PyTorch-layout) entry point, explicit block_batch.
    out = jax.block_until_ready(fire_forward(x, *params, block_batch=2))
    assert out.shape == (B, E1 + E3, H, W), out.shape
    err = float(jnp.max(jnp.abs(out.astype(jnp.float32) - ref)))
    assert jnp.allclose(out.astype(jnp.float32), ref, atol=3e-2, rtol=3e-2), err

    # NHWC chained-path entry point, auto tiling.
    x_nhwc = jnp.transpose(x, (0, 2, 3, 1))
    out_nhwc = jax.block_until_ready(fire_forward_nhwc(x_nhwc, *params))
    ref_nhwc = jnp.transpose(ref, (0, 2, 3, 1))
    err2 = float(jnp.max(jnp.abs(out_nhwc.astype(jnp.float32) - ref_nhwc)))
    assert jnp.allclose(out_nhwc.astype(jnp.float32), ref_nhwc,
                        atol=3e-2, rtol=3e-2), err2

    print("KERNEL_OK")
</pallas_src>

<mosaic_0001>
module attributes {stable_mosaic.version = 11 : i64} {
  func.func @kernel(%arg0: i32, %arg1: i32, %arg2: memref<2x16x16x4xbf16, #tpu.memory_space<vmem>>, %arg3: memref<4x2xbf16, #tpu.memory_space<vmem>>, %arg4: memref<1x2xf32, #tpu.memory_space<vmem>>, %arg5: memref<2x4xbf16, #tpu.memory_space<vmem>>, %arg6: memref<18x4xbf16, #tpu.memory_space<vmem>>, %arg7: memref<1x8xf32, #tpu.memory_space<vmem>>, %arg8: memref<2x8x16x8xbf16, #tpu.memory_space<vmem>>) attributes {dimension_semantics = [#tpu.dimension_semantics<parallel>, #tpu.dimension_semantics<parallel>], iteration_bounds = array<i64: 1, 2>, scalar_prefetch = 0 : i64, scratch_operands = 0 : i64, tpu.core_type = #tpu.core_type<tc>, window_params = [{transform_indices = @transform_0, window_bounds = array<i64: 2, 16, 16, 4>}, {pipeline_mode = #tpu.pipeline_mode<synchronous>, transform_indices = @transform_1, window_bounds = array<i64: 4, 2>}, {pipeline_mode = #tpu.pipeline_mode<synchronous>, transform_indices = @transform_2, window_bounds = array<i64: 1, 2>}, {pipeline_mode = #tpu.pipeline_mode<synchronous>, transform_indices = @transform_3, window_bounds = array<i64: 2, 4>}, {pipeline_mode = #tpu.pipeline_mode<synchronous>, transform_indices = @transform_4, window_bounds = array<i64: 18, 4>}, {pipeline_mode = #tpu.pipeline_mode<synchronous>, transform_indices = @transform_5, window_bounds = array<i64: 1, 8>}, {transform_indices = @transform_6, window_bounds = array<i64: 2, 8, 16, 8>}]} {
    %c8_i32 = arith.constant 8 : i32
    %0 = arith.muli %arg1, %c8_i32 : i32
    %c1_i32 = arith.constant 1 : i32
    %1 = arith.subi %0, %c1_i32 : i32
    %c0_i32 = arith.constant 0 : i32
    %2 = arith.maxsi %1, %c0_i32 : i32
    %c0 = arith.constant 0 : index
    %3 = arith.index_cast %2 : i32 to index
    %c0_0 = arith.constant 0 : index
    %c0_1 = arith.constant 0 : index
    %4 = vector.load %arg2[%c0, %3, %c0_0, %c0_1] : memref<2x16x16x4xbf16, #tpu.memory_space<vmem>>, vector<2x1x16x4xbf16>
    %c0_2 = arith.constant 0 : index
    %5 = arith.index_cast %0 : i32 to index
    %c0_3 = arith.constant 0 : index
    %c0_4 = arith.constant 0 : index
    %6 = vector.load %arg2[%c0_2, %5, %c0_3, %c0_4] : memref<2x16x16x4xbf16, #tpu.memory_space<vmem>>, vector<2x8x16x4xbf16>
    %c8_i32_5 = arith.constant 8 : i32
    %7 = arith.addi %0, %c8_i32_5 : i32
    %c15_i32 = arith.constant 15 : i32
    %8 = arith.minsi %7, %c15_i32 : i32
    %c0_6 = arith.constant 0 : index
    %9 = arith.index_cast %8 : i32 to index
    %c0_7 = arith.constant 0 : index
    %c0_8 = arith.constant 0 : index
    %10 = vector.load %arg2[%c0_6, %9, %c0_7, %c0_8] : memref<2x16x16x4xbf16, #tpu.memory_space<vmem>>, vector<2x1x16x4xbf16>
    %11 = tpu.concatenate %4, %6, %10 in 1 : vector<2x1x16x4xbf16>, vector<2x8x16x4xbf16>, vector<2x1x16x4xbf16> -> vector<2x10x16x4xbf16>
    %12 = vector.shape_cast %11 : vector<2x10x16x4xbf16> to vector<320x4xbf16>
    %c0_9 = arith.constant 0 : index
    %c0_10 = arith.constant 0 : index
    %13 = vector.load %arg3[%c0_9, %c0_10] : memref<4x2xbf16, #tpu.memory_space<vmem>>, vector<4x2xbf16>
    %cst = arith.constant dense<0.000000e+00> : vector<320x2xf32>
    %14 = tpu.matmul %12, %13, %cst {dimension_numbers = #tpu.dot_dimension_numbers<[1], [0], [0], [1], [0, 0, 1, 1], [], []>} : vector<320x4xbf16>, vector<4x2xbf16>, vector<320x2xf32> -> vector<320x2xf32>
    %c0_11 = arith.constant 0 : index
    %c0_12 = arith.constant 0 : index
    %15 = vector.load %arg4[%c0_11, %c0_12] : memref<1x2xf32, #tpu.memory_space<vmem>>, vector<1x2xf32>
    %16 = vector.broadcast %15 : vector<1x2xf32> to vector<320x2xf32>
    %17 = arith.addf %14, %16 : vector<320x2xf32>
    %cst_13 = arith.constant 0.000000e+00 : f32
    %18 = vector.broadcast %cst_13 : f32 to vector<320x2xf32>
    %19 = arith.maximumf %17, %18 : vector<320x2xf32>
    %20 = vector.shape_cast %19 : vector<320x2xf32> to vector<2x10x16x2xf32>
    %21 = tpu.iota {dimensions = array<i32: 1>} : vector<1x10x1x1xi32>
    %c1_i32_14 = arith.constant 1 : i32
    %22 = arith.subi %0, %c1_i32_14 : i32
    %23 = vector.broadcast %22 : i32 to vector<1x10x1x1xi32>
    %24 = arith.addi %21, %23 : vector<1x10x1x1xi32>
    %c0_i32_15 = arith.constant 0 : i32
    %25 = vector.broadcast %c0_i32_15 : i32 to vector<1x10x1x1xi32>
    %26 = arith.cmpi sge, %24, %25 : vector<1x10x1x1xi32>
    %c16_i32 = arith.constant 16 : i32
    %27 = vector.broadcast %c16_i32 : i32 to vector<1x10x1x1xi32>
    %28 = arith.cmpi slt, %24, %27 : vector<1x10x1x1xi32>
    %29 = arith.andi %26, %28 : vector<1x10x1x1xi1>
    %cst_16 = arith.constant 0.000000e+00 : f32
    %30 = vector.shape_cast %29 : vector<1x10x1x1xi1> to vector<1x10x1x1xi1>
    %31 = vector.broadcast %30 : vector<1x10x1x1xi1> to vector<2x10x16x2xi1>
    %32 = vector.broadcast %cst_16 : f32 to vector<2x10x16x2xf32>
    %33 = arith.select %31, %20, %32 : vector<2x10x16x2xi1>, vector<2x10x16x2xf32>
    %34 = arith.truncf %33 : vector<2x10x16x2xf32> to vector<2x10x16x2xbf16>
    %35 = vector.extract_strided_slice %34 {offsets = [0, 1, 0, 0], sizes = [2, 8, 16, 2], strides = [1, 1, 1, 1]} : vector<2x10x16x2xbf16> to vector<2x8x16x2xbf16>
    %36 = vector.shape_cast %35 : vector<2x8x16x2xbf16> to vector<256x2xbf16>
    %c0_17 = arith.constant 0 : index
    %c0_18 = arith.constant 0 : index
    %37 = vector.load %arg5[%c0_17, %c0_18] : memref<2x4xbf16, #tpu.memory_space<vmem>>, vector<2x4xbf16>
    %cst_19 = arith.constant dense<0.000000e+00> : vector<256x4xf32>
    %38 = tpu.matmul %36, %37, %cst_19 {dimension_numbers = #tpu.dot_dimension_numbers<[1], [0], [0], [1], [0, 0, 1, 1], [], []>} : vector<256x2xbf16>, vector<2x4xbf16>, vector<256x4xf32> -> vector<256x4xf32>
    %cst_20 = arith.constant 0.000000e+00 : bf16
    %39 = vector.broadcast %cst_20 : bf16 to vector<2x10x1x2xbf16>
    %40 = tpu.concatenate %39, %34, %39 in 2 : vector<2x10x1x2xbf16>, vector<2x10x16x2xbf16>, vector<2x10x1x2xbf16> -> vector<2x10x18x2xbf16>
    %41 = vector.extract_strided_slice %40 {offsets = [0, 0, 0, 0], sizes = [2, 8, 18, 2], strides = [1, 1, 1, 1]} : vector<2x10x18x2xbf16> to vector<2x8x18x2xbf16>
    %42 = vector.extract_strided_slice %41 {offsets = [0, 0, 0, 0], sizes = [2, 8, 16, 2], strides = [1, 1, 1, 1]} : vector<2x8x18x2xbf16> to vector<2x8x16x2xbf16>
    %43 = vector.extract_strided_slice %41 {offsets = [0, 0, 1, 0], sizes = [2, 8, 16, 2], strides = [1, 1, 1, 1]} : vector<2x8x18x2xbf16> to vector<2x8x16x2xbf16>
    %44 = vector.extract_strided_slice %41 {offsets = [0, 0, 2, 0], sizes = [2, 8, 16, 2], strides = [1, 1, 1, 1]} : vector<2x8x18x2xbf16> to vector<2x8x16x2xbf16>
    %45 = vector.extract_strided_slice %40 {offsets = [0, 1, 0, 0], sizes = [2, 8, 18, 2], strides = [1, 1, 1, 1]} : vector<2x10x18x2xbf16> to vector<2x8x18x2xbf16>
    %46 = vector.extract_strided_slice %45 {offsets = [0, 0, 0, 0], sizes = [2, 8, 16, 2], strides = [1, 1, 1, 1]} : vector<2x8x18x2xbf16> to vector<2x8x16x2xbf16>
    %47 = vector.extract_strided_slice %45 {offsets = [0, 0, 1, 0], sizes = [2, 8, 16, 2], strides = [1, 1, 1, 1]} : vector<2x8x18x2xbf16> to vector<2x8x16x2xbf16>
    %48 = vector.extract_strided_slice %45 {offsets = [0, 0, 2, 0], sizes = [2, 8, 16, 2], strides = [1, 1, 1, 1]} : vector<2x8x18x2xbf16> to vector<2x8x16x2xbf16>
    %49 = vector.extract_strided_slice %40 {offsets = [0, 2, 0, 0], sizes = [2, 8, 18, 2], strides = [1, 1, 1, 1]} : vector<2x10x18x2xbf16> to vector<2x8x18x2xbf16>
    %50 = vector.extract_strided_slice %49 {offsets = [0, 0, 0, 0], sizes = [2, 8, 16, 2], strides = [1, 1, 1, 1]} : vector<2x8x18x2xbf16> to vector<2x8x16x2xbf16>
    %51 = vector.extract_strided_slice %49 {offsets = [0, 0, 1, 0], sizes = [2, 8, 16, 2], strides = [1, 1, 1, 1]} : vector<2x8x18x2xbf16> to vector<2x8x16x2xbf16>
    %52 = vector.extract_strided_slice %49 {offsets = [0, 0, 2, 0], sizes = [2, 8, 16, 2], strides = [1, 1, 1, 1]} : vector<2x8x18x2xbf16> to vector<2x8x16x2xbf16>
    %53 = tpu.concatenate %42, %43, %44, %46, %47, %48, %50, %51, %52 in 3 : vector<2x8x16x2xbf16>, vector<2x8x16x2xbf16>, vector<2x8x16x2xbf16>, vector<2x8x16x2xbf16>, vector<2x8x16x2xbf16>, vector<2x8x16x2xbf16>, vector<2x8x16x2xbf16>, vector<2x8x16x2xbf16>, vector<2x8x16x2xbf16> -> vector<2x8x16x18xbf16>
    %54 = vector.shape_cast %53 : vector<2x8x16x18xbf16> to vector<256x18xbf16>
    %c0_21 = arith.constant 0 : index
    %c0_22 = arith.constant 0 : index
    %55 = vector.load %arg6[%c0_21, %c0_22] : memref<18x4xbf16, #tpu.memory_space<vmem>>, vector<18x4xbf16>
    %cst_23 = arith.constant dense<0.000000e+00> : vector<256x4xf32>
    %56 = tpu.matmul %54, %55, %cst_23 {dimension_numbers = #tpu.dot_dimension_numbers<[1], [0], [0], [1], [0, 0, 1, 1], [], []>} : vector<256x18xbf16>, vector<18x4xbf16>, vector<256x4xf32> -> vector<256x4xf32>
    %57 = tpu.concatenate %38, %56 in 1 : vector<256x4xf32>, vector<256x4xf32> -> vector<256x8xf32>
    %c0_24 = arith.constant 0 : index
    %c0_25 = arith.constant 0 : index
    %58 = vector.load %arg7[%c0_24, %c0_25] : memref<1x8xf32, #tpu.memory_space<vmem>>, vector<1x8xf32>
    %59 = vector.broadcast %58 : vector<1x8xf32> to vector<256x8xf32>
    %60 = arith.addf %57, %59 : vector<256x8xf32>
    %cst_26 = arith.constant 0.000000e+00 : f32
    %61 = vector.broadcast %cst_26 : f32 to vector<256x8xf32>
    %62 = arith.maximumf %60, %61 : vector<256x8xf32>
    %63 = vector.shape_cast %62 : vector<256x8xf32> to vector<2x8x16x8xf32>
    %64 = arith.truncf %63 : vector<2x8x16x8xf32> to vector<2x8x16x8xbf16>
    %c0_27 = arith.constant 0 : index
    %c0_28 = arith.constant 0 : index
    %c0_29 = arith.constant 0 : index
    %c0_30 = arith.constant 0 : index
    %65 = vector.load %arg8[%c0_27, %c0_28, %c0_29, %c0_30] : memref<2x8x16x8xbf16, #tpu.memory_space<vmem>>, vector<2x8x16x8xbf16>
    tpu.vector_store %arg8[%c0_27, %c0_28, %c0_29, %c0_30], %64 {strides = array<i32>} : memref<2x8x16x8xbf16, #tpu.memory_space<vmem>>, vector<2x8x16x8xbf16>,
    return
  }
  func.func @transform_0(%arg0: i32, %arg1: i32) -> (i32, i32, i32, i32) {
    %c0_i32 = arith.constant 0 : i32
    %c0_i32_0 = arith.constant 0 : i32
    %c0_i32_1 = arith.constant 0 : i32
    %c0_i32_2 = arith.constant 0 : i32
    return %arg0, %c0_i32, %c0_i32_0, %c0_i32_1 : i32, i32, i32, i32
  }
  func.func @transform_1(%arg0: i32, %arg1: i32) -> (i32, i32) {
    %c0_i32 = arith.constant 0 : i32
    %c0_i32_0 = arith.constant 0 : i32
    %c0_i32_1 = arith.constant 0 : i32
    return %c0_i32, %c0_i32_0 : i32, i32
  }
  func.func @transform_2(%arg0: i32, %arg1: i32) -> (i32, i32) {
    %c0_i32 = arith.constant 0 : i32
    %c0_i32_0 = arith.constant 0 : i32
    %c0_i32_1 = arith.constant 0 : i32
    return %c0_i32, %c0_i32_0 : i32, i32
  }
  func.func @transform_3(%arg0: i32, %arg1: i32) -> (i32, i32) {
    %c0_i32 = arith.constant 0 : i32
    %c0_i32_0 = arith.constant 0 : i32
    %c0_i32_1 = arith.constant 0 : i32
    return %c0_i32, %c0_i32_0 : i32, i32
  }
  func.func @transform_4(%arg0: i32, %arg1: i32) -> (i32, i32) {
    %c0_i32 = arith.constant 0 : i32
    %c0_i32_0 = arith.constant 0 : i32
    %c0_i32_1 = arith.constant 0 : i32
    return %c0_i32, %c0_i32_0 : i32, i32
  }
  func.func @transform_5(%arg0: i32, %arg1: i32) -> (i32, i32) {
    %c0_i32 = arith.constant 0 : i32
    %c0_i32_0 = arith.constant 0 : i32
    %c0_i32_1 = arith.constant 0 : i32
    return %c0_i32, %c0_i32_0 : i32, i32
  }
  func.func @transform_6(%arg0: i32, %arg1: i32) -> (i32, i32, i32, i32) {
    %c0_i32 = arith.constant 0 : i32
    %c0_i32_0 = arith.constant 0 : i32
    %c0_i32_1 = arith.constant 0 : i32
    return %arg0, %arg1, %c0_i32, %c0_i32_0 : i32, i32, i32, i32
  }
}

</mosaic_0001>

<llo_original>
// kernel: fire_forward.1
$region0: #{fire_forward.1}
  #allocation0 [shape = 'u32[]', space=smem, size = 0x4, offset = 0x4, fixed_abs, tag = 'smem constant byte address 0x4 - core index']
  #allocation1 [shape = 'u32[144,128]{1,0:T(1,128)}', space=vmem, size = 0x12000, scoped, tag = 'internal scratch']
  %s0 = inlined_call_operand.vmem [shape: bf16[2,16,16,4], index: 0, kind: input, shape index: {}]
  %s1 = inlined_call_operand.vmem [shape: bf16[4,2], index: 1, kind: input, shape index: {}]
  %s2 = inlined_call_operand.vmem [shape: f32[1,2], index: 2, kind: input, shape index: {}]
  %s3 = inlined_call_operand.vmem [shape: bf16[2,4], index: 3, kind: input, shape index: {}]
  %s4 = inlined_call_operand.vmem [shape: bf16[18,4], index: 4, kind: input, shape index: {}]
  %s5 = inlined_call_operand.vmem [shape: f32[1,8], index: 5, kind: input, shape index: {}]
  %s6 = inlined_call_operand.vmem [shape: bf16[2,16,16,8], index: 6, kind: output, shape index: {}]
  %s7 = sld [smem:[#allocation0]]
  $region94: #{fire_forward.1} parent=0
    _
  %s9 = ssub.s32 1, %s7
  %s10 = scalar_select 0, %s9, %s7
  $region1: #{fire_forward.1} parent=0
    #allocation2 [shape = 'u8[131072]{0}', space=vmem, size = 0x20000, scoped, tag = 'output window, operand 0']
    loop: start=0, step=1, limit=4
    $region2: #{fire_forward.1} parent=1 // loop_pre_header
      _
    $region3: #{fire_forward.1} parent=1 // loop_header
      %s12 = sphi 0, %s16
      %p13 = scmp.ge.s32.totalorder %s12, 4
      %s19 = sphi 0, %s31
      %s20 = sphi 0, %s27
      %s21 = sphi 0, %s19
      %s22 = sphi 0, %s20
      %s23 = sphi 0, %s21
      %s24 = sphi 0, %s22
      %s34 = sphi 0, %s36
      %s37 = sphi 0, %s34
      %s38 = sphi 0, %s37
      %s54 = sphi 0, %s38
      %s58 = sphi 0, %s58
      %s60 = sphi 0, %s58
      %s61 = sphi 0, %s60
      %s75 = sphi 0, %s61
      %s79 = sphi 0, %s79
      %s81 = sphi 0, %s79
      %s82 = sphi 0, %s81
      %s96 = sphi 0, %s82
      %s100 = sphi 0, %s100
      %s102 = sphi 0, %s100
      %s103 = sphi 0, %s102
      %s117 = sphi 0, %s103
      %s121 = sphi 0, %s121
      %s123 = sphi 0, %s121
      %s124 = sphi 0, %s123
      %s138 = sphi 0, %s124
      %s142 = sphi 0, %s142
      %s144 = sphi 0, %s142
      %s145 = sphi 0, %s144
      %s159 = sphi 0, %s145
      %s167 = sphi 0, %s169
      %s170 = sphi 0, %s167
      %s171 = sphi 0, %s170
      %s187 = sphi 0, %s171
    $region4: #{fire_forward.1} parent=1 // loop_header_branch
      %15 = sbr.rel (%p13) target = $region8
    $region5: #{fire_forward.1} parent=1 // loop_body
      %s17 = ssub.s32 %s12, 1
      %s18 = ssub.s32 %s12, 2
      %s25 = sadd.s32 1, %s20
      %p26 = scmp.ge.s32.totalorder %s25, 2
      %s27 = scalar_select %p26, 0, %s25
      %s28 = sadd.s32 1, %s19
      %s29 = scalar_select %p26, %s28, %s19
      %p30 = scmp.ge.s32.totalorder %s29, 1
      %s31 = scalar_select %p30, 0, %s29
      %s32 = ssub.s32 %s19, %s31
      %p33 = scmp.eq.s32.totalorder %s32, 0
      %s35 = sadd.s32 %s34, 1
      %s36 = scalar_select %p33, %s34, %s35
      %p39 = pneg %p33
      %p40 = scmp.eq.s32.totalorder %s12, 1
      %p41 = por %p39, %p40
      %p42 = scmp.ne.s32.totalorder %s34, %s37
      %p43 = scmp.eq.s32.totalorder %s12, 0
      %p44 = por %p42, %p43
      %p45 = scmp.ne.s32.totalorder %s34, %s37
      %p46 = scmp.eq.s32.totalorder %s17, 1
      %p47 = por %p45, %p46
      %p48 = scmp.ne.s32.totalorder %s37, %s38
      %p49 = scmp.eq.s32.totalorder %s17, 0
      %p50 = por %p48, %p49
      %p51 = scmp.ne.s32.totalorder %s37, %s38
      %p52 = scmp.eq.s32.totalorder %s18, 1
      %p53 = por %p51, %p52
      %p55 = scmp.ne.s32.totalorder %s38, %s54
      %p56 = scmp.eq.s32.totalorder %s18, 0
      %p57 = por %p55, %p56
      %s59 = sadd.s32 %s58, 1
      %p62 = scmp.eq.s32.totalorder %s12, 1
      %p63 = scmp.ne.s32.totalorder %s58, %s60
      %p64 = scmp.eq.s32.totalorder %s12, 0
      %p65 = por %p63, %p64
      %p66 = scmp.ne.s32.totalorder %s58, %s60
      %p67 = scmp.eq.s32.totalorder %s17, 1
      %p68 = por %p66, %p67
      %p69 = scmp.ne.s32.totalorder %s60, %s61
      %p70 = scmp.eq.s32.totalorder %s17, 0
      %p71 = por %p69, %p70
      %p72 = scmp.ne.s32.totalorder %s60, %s61
      %p73 = scmp.eq.s32.totalorder %s18, 1
      %p74 = por %p72, %p73
      %p76 = scmp.ne.s32.totalorder %s61, %s75
      %p77 = scmp.eq.s32.totalorder %s18, 0
      %p78 = por %p76, %p77
      %s80 = sadd.s32 %s79, 1
      %p83 = scmp.eq.s32.totalorder %s12, 1
      %p84 = scmp.ne.s32.totalorder %s79, %s81
      %p85 = scmp.eq.s32.totalorder %s12, 0
      %p86 = por %p84, %p85
      %p87 = scmp.ne.s32.totalorder %s79, %s81
      %p88 = scmp.eq.s32.totalorder %s17, 1
      %p89 = por %p87, %p88
      %p90 = scmp.ne.s32.totalorder %s81, %s82
      %p91 = scmp.eq.s32.totalorder %s17, 0
      %p92 = por %p90, %p91
      %p93 = scmp.ne.s32.totalorder %s81, %s82
      %p94 = scmp.eq.s32.totalorder %s18, 1
      %p95 = por %p93, %p94
      %p97 = scmp.ne.s32.totalorder %s82, %s96
      %p98 = scmp.eq.s32.totalorder %s18, 0
      %p99 = por %p97, %p98
      %s101 = sadd.s32 %s100, 1
      %p104 = scmp.eq.s32.totalorder %s12, 1
      %p105 = scmp.ne.s32.totalorder %s100, %s102
      %p106 = scmp.eq.s32.totalorder %s12, 0
      %p107 = por %p105, %p106
      %p108 = scmp.ne.s32.totalorder %s100, %s102
      %p109 = scmp.eq.s32.totalorder %s17, 1
      %p110 = por %p108, %p109
      %p111 = scmp.ne.s32.totalorder %s102, %s103
      %p112 = scmp.eq.s32.totalorder %s17, 0
      %p113 = por %p111, %p112
      %p114 = scmp.ne.s32.totalorder %s102, %s103
      %p115 = scmp.eq.s32.totalorder %s18, 1
      %p116 = por %p114, %p115
      %p118 = scmp.ne.s32.totalorder %s103, %s117
      %p119 = scmp.eq.s32.totalorder %s18, 0
      %p120 = por %p118, %p119
      %s122 = sadd.s32 %s121, 1
      %p125 = scmp.eq.s32.totalorder %s12, 1
      %p126 = scmp.ne.s32.totalorder %s121, %s123
      %p127 = scmp.eq.s32.totalorder %s12, 0
      %p128 = por %p126, %p127
      %p129 = scmp.ne.s32.totalorder %s121, %s123
      %p130 = scmp.eq.s32.totalorder %s17, 1
      %p131 = por %p129, %p130
      %p132 = scmp.ne.s32.totalorder %s123, %s124
      %p133 = scmp.eq.s32.totalorder %s17, 0
      %p134 = por %p132, %p133
      %p135 = scmp.ne.s32.totalorder %s123, %s124
      %p136 = scmp.eq.s32.totalorder %s18, 1
      %p137 = por %p135, %p136
      %p139 = scmp.ne.s32.totalorder %s124, %s138
      %p140 = scmp.eq.s32.totalorder %s18, 0
      %p141 = por %p139, %p140
      %s143 = sadd.s32 %s142, 1
      %p146 = scmp.eq.s32.totalorder %s12, 1
      %p147 = scmp.ne.s32.totalorder %s142, %s144
      %p148 = scmp.eq.s32.totalorder %s12, 0
      %p149 = por %p147, %p148
      %p150 = scmp.ne.s32.totalorder %s142, %s144
      %p151 = scmp.eq.s32.totalorder %s17, 1
      %p152 = por %p150, %p151
      %p153 = scmp.ne.s32.totalorder %s144, %s145
      %p154 = scmp.eq.s32.totalorder %s17, 0
      %p155 = por %p153, %p154
      %p156 = scmp.ne.s32.totalorder %s144, %s145
      %p157 = scmp.eq.s32.totalorder %s18, 1
      %p158 = por %p156, %p157
      %p160 = scmp.ne.s32.totalorder %s145, %s159
      %p161 = scmp.eq.s32.totalorder %s18, 0
      %p162 = por %p160, %p161
      %s163 = ssub.s32 %s19, %s31
      %s164 = ssub.s32 %s20, %s27
      %s165 = sor.u32 %s163, %s164
      %p166 = scmp.eq.s32.totalorder %s165, 0
      %s168 = sadd.s32 %s167, 1
      %s169 = scalar_select %p166, %s167, %s168
      %p172 = pneg %p166
      %p173 = scmp.eq.s32.totalorder %s12, 1
      %p174 = por %p172, %p173
      %p175 = scmp.ne.s32.totalorder %s167, %s170
      %p176 = scmp.eq.s32.totalorder %s12, 0
      %p177 = por %p175, %p176
      %p178 = scmp.ne.s32.totalorder %s167, %s170
      %p179 = scmp.eq.s32.totalorder %s17, 1
      %p180 = por %p178, %p179
      %p181 = scmp.ne.s32.totalorder %s170, %s171
      %p182 = scmp.eq.s32.totalorder %s17, 0
      %p183 = por %p181, %p182
      %p184 = scmp.ne.s32.totalorder %s170, %s171
      %p185 = scmp.eq.s32.totalorder %s18, 1
      %p186 = por %p184, %p185
      %p188 = scmp.ne.s32.totalorder %s171, %s187
      %p189 = scmp.eq.s32.totalorder %s18, 0
      %p190 = por %p188, %p189
      %p191 = scmp.le.s32.totalorder 1, %s12
      %p192 = scmp.lt.s32.totalorder %s12, 3
      %p193 = pnand %p191, %p192
      %p194 = pneg %p193
      // Predicated region
      $region9: #{fire_forward.1} parent=5 // pred_check
        _
      $region10: #{fire_forward.1} parent=5 // pred_check_branch
        %196 = sbr.rel (%p193) target = $region12
      $region11: #{fire_forward.1} parent=5 // pred_region
        %s197 = ssub.s32 %s12, 1
        // Predicated region
        $region13: #{fire_forward.1} parent=11 // pred_check
          %p198 = pneg %p50
        $region14: #{fire_forward.1} parent=11 // pred_check_branch
          %200 = sbr.rel (%p198) target = $region16
        $region15: #{fire_forward.1} parent=11 // pred_region
          %s201 = smul.u32 2, %s21
          %p202 = scmp.lt.s32.totalorder %s201, 1
          %s203 = scalar_select %p202, %s201, 1
          %s204 = smul.addr %s203, 32
          %s205 = smul.addr %s204, 4
          %s206 = scalar_lea.vmem %s0, %s205
          %s207 = smul.u32 2, %s21
        $region16: #{fire_forward.1} parent=11 // pred_fallthru
          _
        // Predicated region
        $region17: #{fire_forward.1} parent=11 // pred_check
          %p208 = pneg %p71
        $region18: #{fire_forward.1} parent=11 // pred_check_branch
          %210 = sbr.rel (%p208) target = $region20
        $region19: #{fire_forward.1} parent=11 // pred_region
          _
        $region20: #{fire_forward.1} parent=11 // pred_fallthru
          _
        // Predicated region
        $region21: #{fire_forward.1} parent=11 // pred_check
          %p211 = pneg %p92
        $region22: #{fire_forward.1} parent=11 // pred_check_branch
          %213 = sbr.rel (%p211) target = $region24
        $region23: #{fire_forward.1} parent=11 // pred_region
          _
        $region24: #{fire_forward.1} parent=11 // pred_fallthru
          _
        // Predicated region
        $region25: #{fire_forward.1} parent=11 // pred_check
          %p214 = pneg %p113
        $region26: #{fire_forward.1} parent=11 // pred_check_branch
          %216 = sbr.rel (%p214) target = $region28
        $region27: #{fire_forward.1} parent=11 // pred_region
          _
        $region28: #{fire_forward.1} parent=11 // pred_fallthru
          _
        // Predicated region
        $region29: #{fire_forward.1} parent=11 // pred_check
          %p217 = pneg %p134
        $region30: #{fire_forward.1} parent=11 // pred_check_branch
          %219 = sbr.rel (%p217) target = $region32
        $region31: #{fire_forward.1} parent=11 // pred_region
          _
        $region32: #{fire_forward.1} parent=11 // pred_fallthru
          _
        // Predicated region
        $region33: #{fire_forward.1} parent=11 // pred_check
          %p220 = pneg %p155
        $region34: #{fire_forward.1} parent=11 // pred_check_branch
          %222 = sbr.rel (%p220) target = $region36
        $region35: #{fire_forward.1} parent=11 // pred_region
          _
        $region36: #{fire_forward.1} parent=11 // pred_fallthru
          _
      $region12: #{fire_forward.1} parent=5 // pred_fallthru
        _
      %p223 = scmp.lt.s32.totalorder %s12, 2
      // Predicated region
      $region37: #{fire_forward.1} parent=5 // pred_check
        %p224 = pneg %p223
      $region38: #{fire_forward.1} parent=5 // pred_check_branch
        %226 = sbr.rel (%p224) target = $region40
      $region39: #{fire_forward.1} parent=5 // pred_region
        _
      $region40: #{fire_forward.1} parent=5 // pred_fallthru
        _
      %p227 = scmp.le.s32.totalorder 1, %s12
      %p228 = scmp.lt.s32.totalorder %s12, 3
      %p229 = pnand %p227, %p228
      %p230 = pneg %p229
      // Predicated region
      $region41: #{fire_forward.1} parent=5 // pred_check
        _
      $region42: #{fire_forward.1} parent=5 // pred_check_branch
        %232 = sbr.rel (%p229) target = $region44
      $region43: #{fire_forward.1} parent=5 // pred_region
        %s233 = ssub.s32 %s12, 1
        %s234 = smul.u32 2, %s21
        %p235 = scmp.lt.s32.totalorder %s234, 1
        %s236 = scalar_select %p235, %s234, 1
        %s237 = smul.addr %s236, 32
        %s238 = smul.addr %s237, 4
        %s239 = scalar_lea.vmem %s0, %s238
        %p240 = pneg %p50
        %p241 = pneg %p47
        %p242 = pneg %p71
        %p243 = pneg %p68
        %p244 = pneg %p92
        %p245 = pneg %p89
        %p246 = pneg %p113
        %p247 = pneg %p110
        %p248 = pneg %p134
        %p249 = pneg %p131
        %p250 = pneg %p155
        %p251 = pneg %p152
        %p252 = pneg %p183
        %p253 = pneg %p180
        %s254 = sand.u32 %s170, 1
        %s255 = sand.u32 %s170, 1
        %s256 = smul.addr %s255, 128
        %s257 = scalar_lea.vmem [#allocation2], %s256
        %s258 = smul.u32 2, %s21
        %p259 = scmp.lt.s32.totalorder %s258, 1
        %s260 = scalar_select %p259, %s258, 1
        %s261 = smul.addr %s260, 32
        %s262 = smul.addr %s261, 4
        %s263 = scalar_lea.vmem %s0, %s262
        %s264 = smul.u32 2, %s21
        %s265 = smul.u32 2, %s21
        %s266 = smul.u32 8, %s22
        %s268 = smul.u32 %s22, 8
        %s269 = ssub.s32 %s268, 1
        %p270 = scmp.gt.s32.totalorder %s269, 0
        %s271 = scalar_select %p270, %s269, 0
        %s272 = smul.u32 %s271, 2
        %s273 = smul.addr %s272, 4
        %s274 = scalar_lea.vmem %s263, %s273
        %v275 = vld [vmem:[%s274] sm:$0xf]
        %v276 = vld [vmem:[%s274 + $0x4] sm:$0xf]
        %v277 = vld [vmem:[%s274 + $0x80] sm:$0xf]
        %v278 = vld [vmem:[%s274 + $0x84] sm:$0xf]
        %s279 = smul.u32 %s268, 2
        %s280 = smul.addr %s279, 4
        %s281 = scalar_lea.vmem %s263, %s280
        %v282 = vld [vmem:[%s281] sm:$0xf]
        %v283 = vld [vmem:[%s281 + $0x4] sm:$0xf]
        %v284 = vld [vmem:[%s281 + $0x8] sm:$0xf]
        %v285 = vld [vmem:[%s281 + $0xc] sm:$0xf]
        %v286 = vld [vmem:[%s281 + $0x10] sm:$0xf]
        %v287 = vld [vmem:[%s281 + $0x14] sm:$0xf]
        %v288 = vld [vmem:[%s281 + $0x18] sm:$0xf]
        %v289 = vld [vmem:[%s281 + $0x1c] sm:$0xf]
        %v290 = vld [vmem:[%s281 + $0x20] sm:$0xf]
        %v291 = vld [vmem:[%s281 + $0x24] sm:$0xf]
        %v292 = vld [vmem:[%s281 + $0x28] sm:$0xf]
        %v293 = vld [vmem:[%s281 + $0x2c] sm:$0xf]
        %v294 = vld [vmem:[%s281 + $0x30] sm:$0xf]
        %v295 = vld [vmem:[%s281 + $0x34] sm:$0xf]
        %v296 = vld [vmem:[%s281 + $0x38] sm:$0xf]
        %v297 = vld [vmem:[%s281 + $0x3c] sm:$0xf]
        %v298 = vld [vmem:[%s281 + $0x80] sm:$0xf]
        %v299 = vld [vmem:[%s281 + $0x84] sm:$0xf]
        %v300 = vld [vmem:[%s281 + $0x88] sm:$0xf]
        %v301 = vld [vmem:[%s281 + $0x8c] sm:$0xf]
        %v302 = vld [vmem:[%s281 + $0x90] sm:$0xf]
        %v303 = vld [vmem:[%s281 + $0x94] sm:$0xf]
        %v304 = vld [vmem:[%s281 + $0x98] sm:$0xf]
        %v305 = vld [vmem:[%s281 + $0x9c] sm:$0xf]
        %v306 = vld [vmem:[%s281 + $0xa0] sm:$0xf]
        %v307 = vld [vmem:[%s281 + $0xa4] sm:$0xf]
        %v308 = vld [vmem:[%s281 + $0xa8] sm:$0xf]
        %v309 = vld [vmem:[%s281 + $0xac] sm:$0xf]
        %v310 = vld [vmem:[%s281 + $0xb0] sm:$0xf]
        %v311 = vld [vmem:[%s281 + $0xb4] sm:$0xf]
        %v312 = vld [vmem:[%s281 + $0xb8] sm:$0xf]
        %v313 = vld [vmem:[%s281 + $0xbc] sm:$0xf]
        %s314 = sadd.s32 %s268, 8
        %p315 = scmp.lt.s32.totalorder %s314, 15
        %s316 = scalar_select %p315, %s314, 15
        %s317 = smul.u32 %s316, 2
        %s318 = smul.addr %s317, 4
        %s319 = scalar_lea.vmem %s263, %s318
        %v320 = vld [vmem:[%s319] sm:$0xf]
        %v321 = vld [vmem:[%s319 + $0x4] sm:$0xf]
        %v322 = vld [vmem:[%s319 + $0x80] sm:$0xf]
        %v323 = vld [vmem:[%s319 + $0x84] sm:$0xf]
        %v324 = vld [vmem:[%s1] sm:$0x3]
        %v325 = vld [vmem:[%s2] sm:$0x1]
        %v327 = vlaneseq
        %v328 = vshrl.u32 %v327, 7
        %v329 = vsub.s32 0, %v328
        %v330 = vrot.slane %v325, %v329
        %v372 = vunpack.c.l.b16 %v275
        %v373 = vunpack.c.l.b16 %v276
        %v374 = vunpack.c.l.b16 %v282
        %v375 = vunpack.c.l.b16 %v283
        %v376 = vunpack.c.l.b16 %v284
        %v377 = vunpack.c.l.b16 %v285
        %v378 = vunpack.c.l.b16 %v286
        %v379 = vunpack.c.l.b16 %v287
        %v380 = vunpack.c.l.b16 %v288
        %v381 = vunpack.c.l.b16 %v289
        %v382 = vunpack.c.l.b16 %v290
        %v383 = vunpack.c.l.b16 %v291
        %v384 = vunpack.c.l.b16 %v292
        %v385 = vunpack.c.l.b16 %v293
        %v386 = vunpack.c.l.b16 %v294
        %v387 = vunpack.c.l.b16 %v295
        %v388 = vunpack.c.l.b16 %v296
        %v389 = vunpack.c.l.b16 %v297
        %v390 = vunpack.c.l.b16 %v320
        %v391 = vunpack.c.l.b16 %v321
        %v392 = vunpack.c.l.b16 %v277
        %v393 = vunpack.c.l.b16 %v278
        %v394 = vunpack.c.l.b16 %v298
        %v395 = vunpack.c.l.b16 %v299
        %v396 = vunpack.c.l.b16 %v300
        %v397 = vunpack.c.l.b16 %v301
        %v398 = vunpack.c.l.b16 %v302
        %v399 = vunpack.c.l.b16 %v303
        %v400 = vunpack.c.l.b16 %v304
        %v401 = vunpack.c.l.b16 %v305
        %v402 = vunpack.c.l.b16 %v306
        %v403 = vunpack.c.l.b16 %v307
        %v404 = vunpack.c.l.b16 %v308
        %v405 = vunpack.c.l.b16 %v309
        %v406 = vunpack.c.l.b16 %v310
        %v407 = vunpack.c.l.b16 %v311
        %v408 = vunpack.c.l.b16 %v312
        %v409 = vunpack.c.l.b16 %v313
        %v410 = vunpack.c.l.b16 %v322
        %v411 = vunpack.c.l.b16 %v323
        %v412 = vpack.c.b16 %v373, %v372
        %v413 = vpack.c.b16 %v375, %v374
        %v414 = vpack.c.b16 %v377, %v376
        %v415 = vpack.c.b16 %v379, %v378
        %v416 = vpack.c.b16 %v381, %v380
        %v417 = vpack.c.b16 %v383, %v382
        %v418 = vpack.c.b16 %v385, %v384
        %v419 = vpack.c.b16 %v387, %v386
        %v420 = vpack.c.b16 %v389, %v388
        %v421 = vpack.c.b16 %v391, %v390
        %v422 = vpack.c.b16 %v393, %v392
        %v423 = vpack.c.b16 %v395, %v394
        %v424 = vpack.c.b16 %v397, %v396
        %v425 = vpack.c.b16 %v399, %v398
        %v426 = vpack.c.b16 %v401, %v400
        %v427 = vpack.c.b16 %v403, %v402
        %v428 = vpack.c.b16 %v405, %v404
        %v429 = vpack.c.b16 %v407, %v406
        %v430 = vpack.c.b16 %v409, %v408
        %v431 = vpack.c.b16 %v411, %v410
        %vm432 = vcmask 31744
        %v434 = vsel %vm432, %v412, 0
        %v437 = vsel %vm432, %v413, 0
        %v440 = vsel %vm432, %v414, 0
        %v443 = vsel %vm432, %v415, 0
        %v446 = vsel %vm432, %v416, 0
        %v449 = vsel %vm432, %v417, 0
        %v452 = vsel %vm432, %v418, 0
        %v455 = vsel %vm432, %v419, 0
        %v458 = vsel %vm432, %v420, 0
        %v461 = vsel %vm432, %v421, 0
        %v464 = vsel %vm432, %v422, 0
        %v467 = vsel %vm432, %v423, 0
        %v470 = vsel %vm432, %v424, 0
        %v473 = vsel %vm432, %v425, 0
        %v476 = vsel %vm432, %v426, 0
        %v479 = vsel %vm432, %v427, 0
        %v482 = vsel %vm432, %v428, 0
        %v485 = vsel %vm432, %v429, 0
        %v488 = vsel %vm432, %v430, 0
        %v491 = vsel %vm432, %v431, 0
        %vm493 = vcmask 1041408
        %v495 = vsel %vm493, %v324, 0
        %497 = vmatprep.subr.bf16.mxu0 0
        %498 = vmatpush1.bf16.msra.mxu0 %v495
        %499 = vmatprep.subr.bf16.mxu0 0
        %500 = vmatpush1.bf16.msra.mxu0 0
        %501 = vmatprep.subr.bf16.mxu0 0
        %502 = vmatpush1.bf16.msra.mxu0 0
        %503 = vmatprep.subr.bf16.mxu0 0
        %504 = vmatpush1.bf16.msra.mxu0 0
        %505 = vmatprep.subr.bf16.mxu0 0
        %506 = vmatpush1.bf16.msra.mxu0 0
        %507 = vmatprep.subr.bf16.mxu0 0
        %508 = vmatpush1.bf16.msra.mxu0 0
        %509 = vmatprep.subr.bf16.mxu0 0
        %510 = vmatpush1.bf16.msra.mxu0 0
        %511 = vmatprep.subr.bf16.mxu0 0
        %512 = vmatpush1.bf16.msra.mxu0 0
        %513 = vmatprep.subr.bf16.mxu0 0
        %514 = vmatpush1.bf16.msra.mxu0 0
        %515 = vmatprep.subr.bf16.mxu0 0
        %516 = vmatpush1.bf16.msra.mxu0 0
        %517 = vmatprep.subr.bf16.mxu0 0
        %518 = vmatpush1.bf16.msra.mxu0 0
        %519 = vmatprep.subr.bf16.mxu0 0
        %520 = vmatpush1.bf16.msra.mxu0 0
        %521 = vmatprep.subr.bf16.mxu0 0
        %522 = vmatpush1.bf16.msra.mxu0 0
        %523 = vmatprep.subr.bf16.mxu0 0
        %524 = vmatpush1.bf16.msra.mxu0 0
        %525 = vmatprep.subr.bf16.mxu0 0
        %526 = vmatpush1.bf16.msra.mxu0 0
        %527 = vmatprep.subr.bf16.mxu0 0
        %528 = vmatpush1.bf16.msra.mxu0 0
        %529 = vmatprep.mubr.bf16.mxu0 0
        %530 = vmatmul.mubr.bf16.gmra.mrb[0].mxu0 %v434
        %v531 = vpop.f32.mrb[0].mxu0
        %v532 = vadd.f32 %v330, %v531
        %v533 = vpop.f32.mrb[0].mxu0
        %v534 = vpop.f32.mrb[0].mxu0
        %v535 = vadd.f32 %v330, %v534
        %v536 = vpop.f32.mrb[0].mxu0
        %537 = vmatprep.mubr.bf16.mxu0 0
        %538 = vmatmul.mubr.bf16.gmra.mrb[0].mxu0 %v437
        %v539 = vpop.f32.mrb[0].mxu0
        %v540 = vadd.f32 %v330, %v539
        %v541 = vpop.f32.mrb[0].mxu0
        %v542 = vpop.f32.mrb[0].mxu0
        %v543 = vadd.f32 %v330, %v542
        %v544 = vpop.f32.mrb[0].mxu0
        %545 = vmatprep.mubr.bf16.mxu0 0
        %546 = vmatmul.mubr.bf16.gmra.mrb[0].mxu0 %v440
        %v547 = vpop.f32.mrb[0].mxu0
        %v548 = vadd.f32 %v330, %v547
        %v549 = vpop.f32.mrb[0].mxu0
        %v550 = vpop.f32.mrb[0].mxu0
        %v551 = vadd.f32 %v330, %v550
        %v552 = vpop.f32.mrb[0].mxu0
        %553 = vmatprep.mubr.bf16.mxu0 0
        %554 = vmatmul.mubr.bf16.gmra.mrb[0].mxu0 %v443
        %v555 = vpop.f32.mrb[0].mxu0
        %v556 = vadd.f32 %v330, %v555
        %v557 = vpop.f32.mrb[0].mxu0
        %v558 = vpop.f32.mrb[0].mxu0
        %v559 = vadd.f32 %v330, %v558
        %v560 = vpop.f32.mrb[0].mxu0
        %561 = vmatprep.mubr.bf16.mxu0 0
        %562 = vmatmul.mubr.bf16.gmra.mrb[0].mxu0 %v446
        %v563 = vpop.f32.mrb[0].mxu0
        %v564 = vadd.f32 %v330, %v563
        %v565 = vpop.f32.mrb[0].mxu0
        %v566 = vpop.f32.mrb[0].mxu0
        %v567 = vadd.f32 %v330, %v566
        %v568 = vpop.f32.mrb[0].mxu0
        %569 = vmatprep.mubr.bf16.mxu0 0
        %570 = vmatmul.mubr.bf16.gmra.mrb[0].mxu0 %v449
        %v571 = vpop.f32.mrb[0].mxu0
        %v572 = vadd.f32 %v330, %v571
        %v573 = vpop.f32.mrb[0].mxu0
        %v574 = vpop.f32.mrb[0].mxu0
        %v575 = vadd.f32 %v330, %v574
        %v576 = vpop.f32.mrb[0].mxu0
        %577 = vmatprep.mubr.bf16.mxu0 0
        %578 = vmatmul.mubr.bf16.gmra.mrb[0].mxu0 %v452
        %v579 = vpop.f32.mrb[0].mxu0
        %v580 = vadd.f32 %v330, %v579
        %v581 = vpop.f32.mrb[0].mxu0
        %v582 = vpop.f32.mrb[0].mxu0
        %v583 = vadd.f32 %v330, %v582
        %v584 = vpop.f32.mrb[0].mxu0
        %585 = vmatprep.mubr.bf16.mxu0 0
        %586 = vmatmul.mubr.bf16.gmra.mrb[0].mxu0 %v455
        %v587 = vpop.f32.mrb[0].mxu0
        %v588 = vadd.f32 %v330, %v587
        %v589 = vpop.f32.mrb[0].mxu0
        %v590 = vpop.f32.mrb[0].mxu0
        %v591 = vadd.f32 %v330, %v590
        %v592 = vpop.f32.mrb[0].mxu0
        %593 = vmatprep.mubr.bf16.mxu0 0
        %594 = vmatmul.mubr.bf16.gmra.mrb[0].mxu0 %v458
        %v595 = vpop.f32.mrb[0].mxu0
        %v596 = vadd.f32 %v330, %v595
        %v597 = vpop.f32.mrb[0].mxu0
        %v598 = vpop.f32.mrb[0].mxu0
        %v599 = vadd.f32 %v330, %v598
        %v600 = vpop.f32.mrb[0].mxu0
        %601 = vmatprep.mubr.bf16.mxu0 0
        %602 = vmatmul.mubr.bf16.gmra.mrb[0].mxu0 %v461
        %v603 = vpop.f32.mrb[0].mxu0
        %v604 = vadd.f32 %v330, %v603
        %v605 = vpop.f32.mrb[0].mxu0
        %v606 = vpop.f32.mrb[0].mxu0
        %v607 = vadd.f32 %v330, %v606
        %v608 = vpop.f32.mrb[0].mxu0
        %609 = vmatprep.mubr.bf16.mxu0 0
        %610 = vmatmul.mubr.bf16.gmra.mrb[0].mxu0 %v464
        %v611 = vpop.f32.mrb[0].mxu0
        %v612 = vadd.f32 %v330, %v611
        %v613 = vpop.f32.mrb[0].mxu0
        %v614 = vpop.f32.mrb[0].mxu0
        %v615 = vadd.f32 %v330, %v614
        %v616 = vpop.f32.mrb[0].mxu0
        %617 = vmatprep.mubr.bf16.mxu0 0
        %618 = vmatmul.mubr.bf16.gmra.mrb[0].mxu0 %v467
        %v619 = vpop.f32.mrb[0].mxu0
        %v620 = vadd.f32 %v330, %v619
        %v621 = vpop.f32.mrb[0].mxu0
        %v622 = vpop.f32.mrb[0].mxu0
        %v623 = vadd.f32 %v330, %v622
        %v624 = vpop.f32.mrb[0].mxu0
        %625 = vmatprep.mubr.bf16.mxu0 0
        %626 = vmatmul.mubr.bf16.gmra.mrb[0].mxu0 %v470
        %v627 = vpop.f32.mrb[0].mxu0
        %v628 = vadd.f32 %v330, %v627
        %v629 = vpop.f32.mrb[0].mxu0
        %v630 = vpop.f32.mrb[0].mxu0
        %v631 = vadd.f32 %v330, %v630
        %v632 = vpop.f32.mrb[0].mxu0
        %633 = vmatprep.mubr.bf16.mxu0 0
        %634 = vmatmul.mubr.bf16.gmra.mrb[0].mxu0 %v473
        %v635 = vpop.f32.mrb[0].mxu0
        %v636 = vadd.f32 %v330, %v635
        %v637 = vpop.f32.mrb[0].mxu0
        %v638 = vpop.f32.mrb[0].mxu0
        %v639 = vadd.f32 %v330, %v638
        %v640 = vpop.f32.mrb[0].mxu0
        %641 = vmatprep.mubr.bf16.mxu0 0
        %642 = vmatmul.mubr.bf16.gmra.mrb[0].mxu0 %v476
        %v643 = vpop.f32.mrb[0].mxu0
        %v644 = vadd.f32 %v330, %v643
        %v645 = vpop.f32.mrb[0].mxu0
        %v646 = vpop.f32.mrb[0].mxu0
        %v647 = vadd.f32 %v330, %v646
        %v648 = vpop.f32.mrb[0].mxu0
        %649 = vmatprep.mubr.bf16.mxu0 0
        %650 = vmatmul.mubr.bf16.gmra.mrb[0].mxu0 %v479
        %v651 = vpop.f32.mrb[0].mxu0
        %v652 = vadd.f32 %v330, %v651
        %v653 = vpop.f32.mrb[0].mxu0
        %v654 = vpop.f32.mrb[0].mxu0
        %v655 = vadd.f32 %v330, %v654
        %v656 = vpop.f32.mrb[0].mxu0
        %657 = vmatprep.mubr.bf16.mxu0 0
        %658 = vmatmul.mubr.bf16.gmra.mrb[0].mxu0 %v482
        %v659 = vpop.f32.mrb[0].mxu0
        %v660 = vadd.f32 %v330, %v659
        %v661 = vpop.f32.mrb[0].mxu0
        %v662 = vpop.f32.mrb[0].mxu0
        %v663 = vadd.f32 %v330, %v662
        %v664 = vpop.f32.mrb[0].mxu0
        %665 = vmatprep.mubr.bf16.mxu0 0
        %666 = vmatmul.mubr.bf16.gmra.mrb[0].mxu0 %v485
        %v667 = vpop.f32.mrb[0].mxu0
        %v668 = vadd.f32 %v330, %v667
        %v669 = vpop.f32.mrb[0].mxu0
        %v670 = vpop.f32.mrb[0].mxu0
        %v671 = vadd.f32 %v330, %v670
        %v672 = vpop.f32.mrb[0].mxu0
        %673 = vmatprep.mubr.bf16.mxu0 0
        %674 = vmatmul.mubr.bf16.gmra.mrb[0].mxu0 %v488
        %v675 = vpop.f32.mrb[0].mxu0
        %v676 = vadd.f32 %v330, %v675
        %v677 = vpop.f32.mrb[0].mxu0
        %v678 = vpop.f32.mrb[0].mxu0
        %v679 = vadd.f32 %v330, %v678
        %v680 = vpop.f32.mrb[0].mxu0
        %681 = vmatprep.mubr.bf16.mxu0 0
        %682 = vmatmul.mubr.bf16.gmra.mrb[0].mxu0 %v491
        %v683 = vpop.f32.mrb[0].mxu0
        %v684 = vadd.f32 %v330, %v683
        %v685 = vpop.f32.mrb[0].mxu0
        %v686 = vpop.f32.mrb[0].mxu0
        %v687 = vadd.f32 %v330, %v686
        %v688 = vpop.f32.mrb[0].mxu0
        %689 = vdwg.mxu0
        %v690 = vmax.f32 %v532, 0.0
        %v691 = vmax.f32 %v535, 0.0
        %v692 = vmax.f32 %v540, 0.0
        %v693 = vmax.f32 %v543, 0.0
        %v694 = vmax.f32 %v548, 0.0
        %v695 = vmax.f32 %v551, 0.0
        %v696 = vmax.f32 %v556, 0.0
        %v697 = vmax.f32 %v559, 0.0
        %v698 = vmax.f32 %v564, 0.0
        %v699 = vmax.f32 %v567, 0.0
        %v700 = vmax.f32 %v572, 0.0
        %v701 = vmax.f32 %v575, 0.0
        %v702 = vmax.f32 %v580, 0.0
        %v703 = vmax.f32 %v583, 0.0
        %v704 = vmax.f32 %v588, 0.0
        %v705 = vmax.f32 %v591, 0.0
        %v706 = vmax.f32 %v596, 0.0
        %v707 = vmax.f32 %v599, 0.0
        %v708 = vmax.f32 %v604, 0.0
        %v709 = vmax.f32 %v607, 0.0
        %v710 = vmax.f32 %v612, 0.0
        %v711 = vmax.f32 %v615, 0.0
        %v712 = vmax.f32 %v620, 0.0
        %v713 = vmax.f32 %v623, 0.0
        %v714 = vmax.f32 %v628, 0.0
        %v715 = vmax.f32 %v631, 0.0
        %v716 = vmax.f32 %v636, 0.0
        %v717 = vmax.f32 %v639, 0.0
        %v718 = vmax.f32 %v644, 0.0
        %v719 = vmax.f32 %v647, 0.0
        %v720 = vmax.f32 %v652, 0.0
        %v721 = vmax.f32 %v655, 0.0
        %v722 = vmax.f32 %v660, 0.0
        %v723 = vmax.f32 %v663, 0.0
        %v724 = vmax.f32 %v668, 0.0
        %v725 = vmax.f32 %v671, 0.0
        %v726 = vmax.f32 %v676, 0.0
        %v727 = vmax.f32 %v679, 0.0
        %v728 = vmax.f32 %v684, 0.0
        %v729 = vmax.f32 %v687, 0.0
        %v730 = vstv %s269
        %v731 = vadd.s32 %v730, 1
        %v732 = vadd.s32 %v730, 2
        %v733 = vadd.s32 %v730, 3
        %v734 = vadd.s32 %v730, 4
        %v735 = vadd.s32 %v730, 5
        %v736 = vadd.s32 %v730, 6
        %v737 = vadd.s32 %v730, 7
        %v738 = vadd.s32 %v730, 8
        %v739 = vadd.s32 %v730, 9
        %vm740 = vcmp.ge.s32.totalorder %v730, 0
        %vm741 = vcmp.ge.s32.totalorder %v731, 0
        %vm742 = vcmp.ge.s32.totalorder %v732, 0
        %vm743 = vcmp.ge.s32.totalorder %v733, 0
        %vm744 = vcmp.ge.s32.totalorder %v734, 0
        %vm745 = vcmp.ge.s32.totalorder %v735, 0
        %vm746 = vcmp.ge.s32.totalorder %v736, 0
        %vm747 = vcmp.ge.s32.totalorder %v737, 0
        %vm748 = vcmp.ge.s32.totalorder %v738, 0
        %vm749 = vcmp.ge.s32.totalorder %v739, 0
        %vm750 = vcmp.lt.s32.totalorder %v730, 16
        %vm751 = vcmp.lt.s32.totalorder %v731, 16
        %vm752 = vcmp.lt.s32.totalorder %v732, 16
        %vm753 = vcmp.lt.s32.totalorder %v733, 16
        %vm754 = vcmp.lt.s32.totalorder %v734, 16
        %vm755 = vcmp.lt.s32.totalorder %v735, 16
        %vm756 = vcmp.lt.s32.totalorder %v736, 16
        %vm757 = vcmp.lt.s32.totalorder %v737, 16
        %vm758 = vcmp.lt.s32.totalorder %v738, 16
        %vm759 = vcmp.lt.s32.totalorder %v739, 16
        %vm760 = vmand %vm740, %vm750
        %vm761 = vmand %vm741, %vm751
        %vm762 = vmand %vm742, %vm752
        %vm763 = vmand %vm743, %vm753
        %vm764 = vmand %vm744, %vm754
        %vm765 = vmand %vm745, %vm755
        %vm766 = vmand %vm746, %vm756
        %vm767 = vmand %vm747, %vm757
        %vm768 = vmand %vm748, %vm758
        %vm769 = vmand %vm749, %vm759
        %v770 = vsel %vm760, 1, 0
        %v771 = vsel %vm761, 1, 0
        %v772 = vsel %vm762, 1, 0
        %v773 = vsel %vm763, 1, 0
        %v774 = vsel %vm764, 1, 0
        %v775 = vsel %vm765, 1, 0
        %v776 = vsel %vm766, 1, 0
        %v777 = vsel %vm767, 1, 0
        %v778 = vsel %vm768, 1, 0
        %v779 = vsel %vm769, 1, 0
        %vm780 = vcmp.eq.s32.totalorder %v770, 1
        %vm781 = vcmp.eq.s32.totalorder %v771, 1
        %vm782 = vcmp.eq.s32.totalorder %v772, 1
        %vm783 = vcmp.eq.s32.totalorder %v773, 1
        %vm784 = vcmp.eq.s32.totalorder %v774, 1
        %vm785 = vcmp.eq.s32.totalorder %v775, 1
        %vm786 = vcmp.eq.s32.totalorder %v776, 1
        %vm787 = vcmp.eq.s32.totalorder %v777, 1
        %vm788 = vcmp.eq.s32.totalorder %v778, 1
        %vm789 = vcmp.eq.s32.totalorder %v779, 1
        %v790 = vsel %vm780, %v690, 0.0
        %v791 = vsel %vm780, %v691, 0.0
        %v792 = vsel %vm781, %v692, 0.0
        %v793 = vsel %vm781, %v693, 0.0
        %v794 = vsel %vm782, %v694, 0.0
        %v795 = vsel %vm782, %v695, 0.0
        %v796 = vsel %vm783, %v696, 0.0
        %v797 = vsel %vm783, %v697, 0.0
        %v798 = vsel %vm784, %v698, 0.0
        %v799 = vsel %vm784, %v699, 0.0
        %v800 = vsel %vm785, %v700, 0.0
        %v801 = vsel %vm785, %v701, 0.0
        %v802 = vsel %vm786, %v702, 0.0
        %v803 = vsel %vm786, %v703, 0.0
        %v804 = vsel %vm787, %v704, 0.0
        %v805 = vsel %vm787, %v705, 0.0
        %v806 = vsel %vm788, %v706, 0.0
        %v807 = vsel %vm788, %v707, 0.0
        %v808 = vsel %vm789, %v708, 0.0
        %v809 = vsel %vm789, %v709, 0.0
        %v810 = vsel %vm780, %v710, 0.0
        %v811 = vsel %vm780, %v711, 0.0
        %v812 = vsel %vm781, %v712, 0.0
        %v813 = vsel %vm781, %v713, 0.0
        %v814 = vsel %vm782, %v714, 0.0
        %v815 = vsel %vm782, %v715, 0.0
        %v816 = vsel %vm783, %v716, 0.0
        %v817 = vsel %vm783, %v717, 0.0
        %v818 = vsel %vm784, %v718, 0.0
        %v819 = vsel %vm784, %v719, 0.0
        %v820 = vsel %vm785, %v720, 0.0
        %v821 = vsel %vm785, %v721, 0.0
        %v822 = vsel %vm786, %v722, 0.0
        %v823 = vsel %vm786, %v723, 0.0
        %v824 = vsel %vm787, %v724, 0.0
        %v825 = vsel %vm787, %v725, 0.0
        %v826 = vsel %vm788, %v726, 0.0
        %v827 = vsel %vm788, %v727, 0.0
        %v828 = vsel %vm789, %v728, 0.0
        %v829 = vsel %vm789, %v729, 0.0
        %v830 = vpack.c.bf16 %v791, %v790
        %v831 = vpack.c.bf16 %v793, %v792
        %v832 = vpack.c.bf16 %v795, %v794
        %v833 = vpack.c.bf16 %v797, %v796
        %v834 = vpack.c.bf16 %v799, %v798
        %v835 = vpack.c.bf16 %v801, %v800
        %v836 = vpack.c.bf16 %v803, %v802
        %v837 = vpack.c.bf16 %v805, %v804
        %v838 = vpack.c.bf16 %v807, %v806
        %v839 = vpack.c.bf16 %v809, %v808
        %v840 = vpack.c.bf16 %v811, %v810
        %v841 = vpack.c.bf16 %v813, %v812
        %v842 = vpack.c.bf16 %v815, %v814
        %v843 = vpack.c.bf16 %v817, %v816
        %v844 = vpack.c.bf16 %v819, %v818
        %v845 = vpack.c.bf16 %v821, %v820
        %v846 = vpack.c.bf16 %v823, %v822
        %v847 = vpack.c.bf16 %v825, %v824
        %v848 = vpack.c.bf16 %v827, %v826
        %v849 = vpack.c.bf16 %v829, %v828
        %v850 = vld [vmem:[%s3] sm:$0x1]
        %vm851 = vcmask 15360
        %v853 = vsel %vm851, %v831, 0
        %v856 = vsel %vm851, %v832, 0
        %v859 = vsel %vm851, %v833, 0
        %v862 = vsel %vm851, %v834, 0
        %v865 = vsel %vm851, %v835, 0
        %v868 = vsel %vm851, %v836, 0
        %v871 = vsel %vm851, %v837, 0
        %v874 = vsel %vm851, %v838, 0
        %v877 = vsel %vm851, %v841, 0
        %v880 = vsel %vm851, %v842, 0
        %v883 = vsel %vm851, %v843, 0
        %v886 = vsel %vm851, %v844, 0
        %v889 = vsel %vm851, %v845, 0
        %v892 = vsel %vm851, %v846, 0
        %v895 = vsel %vm851, %v847, 0
        %v898 = vsel %vm851, %v848, 0
        %vm900 = vcmask 1040384
        %v902 = vsel %vm900, %v850, 0
        %904 = vmatprep.subr.bf16.mxu0 0
        %905 = vmatpush1.bf16.msra.mxu0 %v902
        %906 = vmatprep.subr.bf16.mxu0 0
        %907 = vmatpush1.bf16.msra.mxu0 0
        %908 = vmatprep.subr.bf16.mxu0 0
        %909 = vmatpush1.bf16.msra.mxu0 0
        %910 = vmatprep.subr.bf16.mxu0 0
        %911 = vmatpush1.bf16.msra.mxu0 0
        %912 = vmatprep.subr.bf16.mxu0 0
        %913 = vmatpush1.bf16.msra.mxu0 0
        %914 = vmatprep.subr.bf16.mxu0 0
        %915 = vmatpush1.bf16.msra.mxu0 0
        %916 = vmatprep.subr.bf16.mxu0 0
        %917 = vmatpush1.bf16.msra.mxu0 0
        %918 = vmatprep.subr.bf16.mxu0 0
        %919 = vmatpush1.bf16.msra.mxu0 0
        %920 = vmatprep.subr.bf16.mxu0 0
        %921 = vmatpush1.bf16.msra.mxu0 0
        %922 = vmatprep.subr.bf16.mxu0 0
        %923 = vmatpush1.bf16.msra.mxu0 0
        %924 = vmatprep.subr.bf16.mxu0 0
        %925 = vmatpush1.bf16.msra.mxu0 0
        %926 = vmatprep.subr.bf16.mxu0 0
        %927 = vmatpush1.bf16.msra.mxu0 0
        %928 = vmatprep.subr.bf16.mxu0 0
        %929 = vmatpush1.bf16.msra.mxu0 0
        %930 = vmatprep.subr.bf16.mxu0 0
        %931 = vmatpush1.bf16.msra.mxu0 0
        %932 = vmatprep.subr.bf16.mxu0 0
        %933 = vmatpush1.bf16.msra.mxu0 0
        %934 = vmatprep.subr.bf16.mxu0 0
        %935 = vmatpush1.bf16.msra.mxu0 0
        %936 = vmatprep.mubr.bf16.mxu0 0
        %937 = vmatmul.mubr.bf16.gmra.mrb[0].mxu0 %v853
        %v938 = vpop.f32.mrb[0].mxu0
        %v939 = vadd.f32 0.0, %v938
        %v940 = vpop.f32.mrb[0].mxu0
        %v941 = vpop.f32.mrb[0].mxu0
        %v942 = vadd.f32 0.0, %v941
        %v943 = vpop.f32.mrb[0].mxu0
        %944 = vmatprep.mubr.bf16.mxu0 0
        %945 = vmatmul.mubr.bf16.gmra.mrb[0].mxu0 %v856
        %v946 = vpop.f32.mrb[0].mxu0
        %v947 = vadd.f32 0.0, %v946
        %v948 = vpop.f32.mrb[0].mxu0
        %v949 = vpop.f32.mrb[0].mxu0
        %v950 = vadd.f32 0.0, %v949
        %v951 = vpop.f32.mrb[0].mxu0
        %952 = vmatprep.mubr.bf16.mxu0 0
        %953 = vmatmul.mubr.bf16.gmra.mrb[0].mxu0 %v859
        %v954 = vpop.f32.mrb[0].mxu0
        %v955 = vadd.f32 0.0, %v954
        %v956 = vpop.f32.mrb[0].mxu0
        %v957 = vpop.f32.mrb[0].mxu0
        %v958 = vadd.f32 0.0, %v957
        %v959 = vpop.f32.mrb[0].mxu0
        %960 = vmatprep.mubr.bf16.mxu0 0
        %961 = vmatmul.mubr.bf16.gmra.mrb[0].mxu0 %v862
        %v962 = vpop.f32.mrb[0].mxu0
        %v963 = vadd.f32 0.0, %v962
        %v964 = vpop.f32.mrb[0].mxu0
        %v965 = vpop.f32.mrb[0].mxu0
        %v966 = vadd.f32 0.0, %v965
        %v967 = vpop.f32.mrb[0].mxu0
        %968 = vmatprep.mubr.bf16.mxu0 0
        %969 = vmatmul.mubr.bf16.gmra.mrb[0].mxu0 %v865
        %v970 = vpop.f32.mrb[0].mxu0
        %v971 = vadd.f32 0.0, %v970
        %v972 = vpop.f32.mrb[0].mxu0
        %v973 = vpop.f32.mrb[0].mxu0
        %v974 = vadd.f32 0.0, %v973
        %v975 = vpop.f32.mrb[0].mxu0
        %976 = vmatprep.mubr.bf16.mxu0 0
        %977 = vmatmul.mubr.bf16.gmra.mrb[0].mxu0 %v868
        %v978 = vpop.f32.mrb[0].mxu0
        %v979 = vadd.f32 0.0, %v978
        %v980 = vpop.f32.mrb[0].mxu0
        %v981 = vpop.f32.mrb[0].mxu0
        %v982 = vadd.f32 0.0, %v981
        %v983 = vpop.f32.mrb[0].mxu0
        %984 = vmatprep.mubr.bf16.mxu0 0
        %985 = vmatmul.mubr.bf16.gmra.mrb[0].mxu0 %v871
        %v986 = vpop.f32.mrb[0].mxu0
        %v987 = vadd.f32 0.0, %v986
        %v988 = vpop.f32.mrb[0].mxu0
        %v989 = vpop.f32.mrb[0].mxu0
        %v990 = vadd.f32 0.0, %v989
        %v991 = vpop.f32.mrb[0].mxu0
        %992 = vmatprep.mubr.bf16.mxu0 0
        %993 = vmatmul.mubr.bf16.gmra.mrb[0].mxu0 %v874
        %v994 = vpop.f32.mrb[0].mxu0
        %v995 = vadd.f32 0.0, %v994
        %v996 = vpop.f32.mrb[0].mxu0
        %v997 = vpop.f32.mrb[0].mxu0
        %v998 = vadd.f32 0.0, %v997
        %v999 = vpop.f32.mrb[0].mxu0
        %1000 = vmatprep.mubr.bf16.mxu0 0
        %1001 = vmatmul.mubr.bf16.gmra.mrb[0].mxu0 %v877
        %v1002 = vpop.f32.mrb[0].mxu0
        %v1003 = vadd.f32 0.0, %v1002
        %v1004 = vpop.f32.mrb[0].mxu0
        %v1005 = vpop.f32.mrb[0].mxu0
        %v1006 = vadd.f32 0.0, %v1005
        %v1007 = vpop.f32.mrb[0].mxu0
        %1008 = vmatprep.mubr.bf16.mxu0 0
        %1009 = vmatmul.mubr.bf16.gmra.mrb[0].mxu0 %v880
        %v1010 = vpop.f32.mrb[0].mxu0
        %v1011 = vadd.f32 0.0, %v1010
        %v1012 = vpop.f32.mrb[0].mxu0
        %v1013 = vpop.f32.mrb[0].mxu0
        %v1014 = vadd.f32 0.0, %v1013
        %v1015 = vpop.f32.mrb[0].mxu0
        %1016 = vmatprep.mubr.bf16.mxu0 0
        %1017 = vmatmul.mubr.bf16.gmra.mrb[0].mxu0 %v883
        %v1018 = vpop.f32.mrb[0].mxu0
        %v1019 = vadd.f32 0.0, %v1018
        %v1020 = vpop.f32.mrb[0].mxu0
        %v1021 = vpop.f32.mrb[0].mxu0
        %v1022 = vadd.f32 0.0, %v1021
        %v1023 = vpop.f32.mrb[0].mxu0
        %1024 = vmatprep.mubr.bf16.mxu0 0
        %1025 = vmatmul.mubr.bf16.gmra.mrb[0].mxu0 %v886
        %v1026 = vpop.f32.mrb[0].mxu0
        %v1027 = vadd.f32 0.0, %v1026
        %v1028 = vpop.f32.mrb[0].mxu0
        %v1029 = vpop.f32.mrb[0].mxu0
        %v1030 = vadd.f32 0.0, %v1029
        %v1031 = vpop.f32.mrb[0].mxu0
        %1032 = vmatprep.mubr.bf16.mxu0 0
        %1033 = vmatmul.mubr.bf16.gmra.mrb[0].mxu0 %v889
        %v1034 = vpop.f32.mrb[0].mxu0
        %v1035 = vadd.f32 0.0, %v1034
        %v1036 = vpop.f32.mrb[0].mxu0
        %v1037 = vpop.f32.mrb[0].mxu0
        %v1038 = vadd.f32 0.0, %v1037
        %v1039 = vpop.f32.mrb[0].mxu0
        %1040 = vmatprep.mubr.bf16.mxu0 0
        %1041 = vmatmul.mubr.bf16.gmra.mrb[0].mxu0 %v892
        %v1042 = vpop.f32.mrb[0].mxu0
        %v1043 = vadd.f32 0.0, %v1042
        %v1044 = vpop.f32.mrb[0].mxu0
        %v1045 = vpop.f32.mrb[0].mxu0
        %v1046 = vadd.f32 0.0, %v1045
        %v1047 = vpop.f32.mrb[0].mxu0
        %1048 = vmatprep.mubr.bf16.mxu0 0
        %1049 = vmatmul.mubr.bf16.gmra.mrb[0].mxu0 %v895
        %v1050 = vpop.f32.mrb[0].mxu0
        %v1051 = vadd.f32 0.0, %v1050
        %v1052 = vpop.f32.mrb[0].mxu0
        %v1053 = vpop.f32.mrb[0].mxu0
        %v1054 = vadd.f32 0.0, %v1053
        %v1055 = vpop.f32.mrb[0].mxu0
        %1056 = vmatprep.mubr.bf16.mxu0 0
        %1057 = vmatmul.mubr.bf16.gmra.mrb[0].mxu0 %v898
        %v1058 = vpop.f32.mrb[0].mxu0
        %v1059 = vadd.f32 0.0, %v1058
        %v1060 = vpop.f32.mrb[0].mxu0
        %v1061 = vpop.f32.mrb[0].mxu0
        %v1062 = vadd.f32 0.0, %v1061
        %v1063 = vpop.f32.mrb[0].mxu0
        %1064 = vdwg.mxu0
        %v1066 = vshrl.u32 %v830, 16
        %v1068 = vrot.slane %v1066, 7
        %v1069 = vshll.u32 %v830, 16
        %v1071 = vor.u32 %v1068, %v1069
        %v1072 = vshrl.u32 %v831, 16
        %v1074 = vrot.slane %v1072, 7
        %v1075 = vshll.u32 %v831, 16
        %v1077 = vor.u32 %v1074, %v1075
        %v1078 = vshrl.u32 %v832, 16
        %v1080 = vrot.slane %v1078, 7
        %v1081 = vshll.u32 %v832, 16
        %v1083 = vor.u32 %v1080, %v1081
        %v1084 = vshrl.u32 %v833, 16
        %v1086 = vrot.slane %v1084, 7
        %v1087 = vshll.u32 %v833, 16
        %v1089 = vor.u32 %v1086, %v1087
        %v1090 = vshrl.u32 %v834, 16
        %v1092 = vrot.slane %v1090, 7
        %v1093 = vshll.u32 %v834, 16
        %v1095 = vor.u32 %v1092, %v1093
        %v1096 = vshrl.u32 %v835, 16
        %v1098 = vrot.slane %v1096, 7
        %v1099 = vshll.u32 %v835, 16
        %v1101 = vor.u32 %v1098, %v1099
        %v1102 = vshrl.u32 %v836, 16
        %v1104 = vrot.slane %v1102, 7
        %v1105 = vshll.u32 %v836, 16
        %v1107 = vor.u32 %v1104, %v1105
        %v1108 = vshrl.u32 %v837, 16
        %v1110 = vrot.slane %v1108, 7
        %v1111 = vshll.u32 %v837, 16
        %v1113 = vor.u32 %v1110, %v1111
        %v1114 = vshrl.u32 %v838, 16
        %v1116 = vrot.slane %v1114, 7
        %v1117 = vshll.u32 %v838, 16
        %v1119 = vor.u32 %v1116, %v1117
        %v1121 = vshrl.u32 %v839, 16
        %v1123 = vrot.slane %v1121, 7
        %v1124 = vshll.u32 %v839, 16
        %v1126 = vor.u32 %v1123, %v1124
        %v1128 = vshrl.u32 %v840, 16
        %v1130 = vrot.slane %v1128, 7
        %v1131 = vshll.u32 %v840, 16
        %v1133 = vor.u32 %v1130, %v1131
        %v1134 = vshrl.u32 %v841, 16
        %v1136 = vrot.slane %v1134, 7
        %v1137 = vshll.u32 %v841, 16
        %v1139 = vor.u32 %v1136, %v1137
        %v1140 = vshrl.u32 %v842, 16
        %v1142 = vrot.slane %v1140, 7
        %v1143 = vshll.u32 %v842, 16
        %v1145 = vor.u32 %v1142, %v1143
        %v1146 = vshrl.u32 %v843, 16
        %v1148 = vrot.slane %v1146, 7
        %v1149 = vshll.u32 %v843, 16
        %v1151 = vor.u32 %v1148, %v1149
        %v1152 = vshrl.u32 %v844, 16
        %v1154 = vrot.slane %v1152, 7
        %v1155 = vshll.u32 %v844, 16
        %v1157 = vor.u32 %v1154, %v1155
        %v1158 = vshrl.u32 %v845, 16
        %v1160 = vrot.slane %v1158, 7
        %v1161 = vshll.u32 %v845, 16
        %v1163 = vor.u32 %v1160, %v1161
        %v1164 = vshrl.u32 %v846, 16
        %v1166 = vrot.slane %v1164, 7
        %v1167 = vshll.u32 %v846, 16
        %v1169 = vor.u32 %v1166, %v1167
        %v1170 = vshrl.u32 %v847, 16
        %v1172 = vrot.slane %v1170, 7
        %v1173 = vshll.u32 %v847, 16
        %v1175 = vor.u32 %v1172, %v1173
        %v1176 = vshrl.u32 %v848, 16
        %v1178 = vrot.slane %v1176, 7
        %v1179 = vshll.u32 %v848, 16
        %v1181 = vor.u32 %v1178, %v1179
        %v1183 = vshrl.u32 %v849, 16
        %v1185 = vrot.slane %v1183, 7
        %v1186 = vshll.u32 %v849, 16
        %v1188 = vor.u32 %v1185, %v1186
        %vm1229 = vcmask 1040384
        %vm1230 = vsmask.f32 256
        %vm1231 = vmand %vm1229, %vm1230
        %v1232 = vsel %vm1231, 0, %v1071
        %v1233 = vsel %vm1231, 0, %v1077
        %v1234 = vsel %vm1231, 0, %v1083
        %v1235 = vsel %vm1231, 0, %v1089
        %v1236 = vsel %vm1231, 0, %v1095
        %v1237 = vsel %vm1231, 0, %v1101
        %v1238 = vsel %vm1231, 0, %v1107
        %v1239 = vsel %vm1231, 0, %v1113
        %v1240 = vsel %vm1231, 0, %v1119
        %v1241 = vsel %vm1231, 0, %v1126
        %v1242 = vsel %vm1231, 0, %v1133
        %v1243 = vsel %vm1231, 0, %v1139
        %v1244 = vsel %vm1231, 0, %v1145
        %v1245 = vsel %vm1231, 0, %v1151
        %v1246 = vsel %vm1231, 0, %v1157
        %v1247 = vsel %vm1231, 0, %v1163
        %v1248 = vsel %vm1231, 0, %v1169
        %v1249 = vsel %vm1231, 0, %v1175
        %v1250 = vsel %vm1231, 0, %v1181
        %v1251 = vsel %vm1231, 0, %v1188
        %v1252 = vsel %vm1231, %v1068, 0
        %v1253 = vsel %vm1231, %v1074, 0
        %v1254 = vsel %vm1231, %v1080, 0
        %v1255 = vsel %vm1231, %v1086, 0
        %v1256 = vsel %vm1231, %v1092, 0
        %v1257 = vsel %vm1231, %v1098, 0
        %v1258 = vsel %vm1231, %v1104, 0
        %v1259 = vsel %vm1231, %v1110, 0
        %v1260 = vsel %vm1231, %v1116, 0
        %v1261 = vsel %vm1231, %v1123, 0
        %v1262 = vsel %vm1231, %v1130, 0
        %v1263 = vsel %vm1231, %v1136, 0
        %v1264 = vsel %vm1231, %v1142, 0
        %v1265 = vsel %vm1231, %v1148, 0
        %v1266 = vsel %vm1231, %v1154, 0
        %v1267 = vsel %vm1231, %v1160, 0
        %v1268 = vsel %vm1231, %v1166, 0
        %v1269 = vsel %vm1231, %v1172, 0
        %v1270 = vsel %vm1231, %v1178, 0
        %v1271 = vsel %vm1231, %v1185, 0
        %vm1272 = vsmask.f32 7424
        %v1274 = vshrl.u32 %v1232, 16
        %v1276 = vshll.u32 %v1232, 16
        %v1278 = vrot.slane %v1276, 1
        %v1279 = vor.u32 %v1274, %v1278
        %v1281 = vshll.u32 %v1252, 16
        %v1283 = vrot.slane %v1281, 1
        %v1284 = vsel %vm1272, %v1279, %v1283
        %v1286 = vshrl.u32 %v1233, 16
        %v1288 = vshll.u32 %v1233, 16
        %v1290 = vrot.slane %v1288, 1
        %v1291 = vor.u32 %v1286, %v1290
        %v1293 = vshll.u32 %v1253, 16
        %v1295 = vrot.slane %v1293, 1
        %v1296 = vsel %vm1272, %v1291, %v1295
        %v1298 = vshrl.u32 %v1234, 16
        %v1300 = vshll.u32 %v1234, 16
        %v1302 = vrot.slane %v1300, 1
        %v1303 = vor.u32 %v1298, %v1302
        %v1305 = vshll.u32 %v1254, 16
        %v1307 = vrot.slane %v1305, 1
        %v1308 = vsel %vm1272, %v1303, %v1307
        %v1310 = vshrl.u32 %v1235, 16
        %v1312 = vshll.u32 %v1235, 16
        %v1314 = vrot.slane %v1312, 1
        %v1315 = vor.u32 %v1310, %v1314
        %v1317 = vshll.u32 %v1255, 16
        %v1319 = vrot.slane %v1317, 1
        %v1320 = vsel %vm1272, %v1315, %v1319
        %v1322 = vshrl.u32 %v1236, 16
        %v1324 = vshll.u32 %v1236, 16
        %v1326 = vrot.slane %v1324, 1
        %v1327 = vor.u32 %v1322, %v1326
        %v1329 = vshll.u32 %v1256, 16
        %v1331 = vrot.slane %v1329, 1
        %v1332 = vsel %vm1272, %v1327, %v1331
        %v1334 = vshrl.u32 %v1237, 16
        %v1336 = vshll.u32 %v1237, 16
        %v1338 = vrot.slane %v1336, 1
        %v1339 = vor.u32 %v1334, %v1338
        %v1341 = vshll.u32 %v1257, 16
        %v1343 = vrot.slane %v1341, 1
        %v1344 = vsel %vm1272, %v1339, %v1343
        %v1346 = vshrl.u32 %v1238, 16
        %v1348 = vshll.u32 %v1238, 16
        %v1350 = vrot.slane %v1348, 1
        %v1351 = vor.u32 %v1346, %v1350
        %v1353 = vshll.u32 %v1258, 16
        %v1355 = vrot.slane %v1353, 1
        %v1356 = vsel %vm1272, %v1351, %v1355
        %v1358 = vshrl.u32 %v1239, 16
        %v1360 = vshll.u32 %v1239, 16
        %v1362 = vrot.slane %v1360, 1
        %v1363 = vor.u32 %v1358, %v1362
        %v1365 = vshll.u32 %v1259, 16
        %v1367 = vrot.slane %v1365, 1
        %v1368 = vsel %vm1272, %v1363, %v1367
        %v1370 = vshrl.u32 %v1242, 16
        %v1372 = vshll.u32 %v1242, 16
        %v1374 = vrot.slane %v1372, 1
        %v1375 = vor.u32 %v1370, %v1374
        %v1377 = vshll.u32 %v1262, 16
        %v1379 = vrot.slane %v1377, 1
        %v1380 = vsel %vm1272, %v1375, %v1379
        %v1382 = vshrl.u32 %v1243, 16
        %v1384 = vshll.u32 %v1243, 16
        %v1386 = vrot.slane %v1384, 1
        %v1387 = vor.u32 %v1382, %v1386
        %v1389 = vshll.u32 %v1263, 16
        %v1391 = vrot.slane %v1389, 1
        %v1392 = vsel %vm1272, %v1387, %v1391
        %v1394 = vshrl.u32 %v1244, 16
        %v1396 = vshll.u32 %v1244, 16
        %v1398 = vrot.slane %v1396, 1
        %v1399 = vor.u32 %v1394, %v1398
        %v1401 = vshll.u32 %v1264, 16
        %v1403 = vrot.slane %v1401, 1
        %v1404 = vsel %vm1272, %v1399, %v1403
        %v1406 = vshrl.u32 %v1245, 16
        %v1408 = vshll.u32 %v1245, 16
        %v1410 = vrot.slane %v1408, 1
        %v1411 = vor.u32 %v1406, %v1410
        %v1413 = vshll.u32 %v1265, 16
        %v1415 = vrot.slane %v1413, 1
        %v1416 = vsel %vm1272, %v1411, %v1415
        %v1418 = vshrl.u32 %v1246, 16
        %v1420 = vshll.u32 %v1246, 16
        %v1422 = vrot.slane %v1420, 1
        %v1423 = vor.u32 %v1418, %v1422
        %v1425 = vshll.u32 %v1266, 16
        %v1427 = vrot.slane %v1425, 1
        %v1428 = vsel %vm1272, %v1423, %v1427
        %v1430 = vshrl.u32 %v1247, 16
        %v1432 = vshll.u32 %v1247, 16
        %v1434 = vrot.slane %v1432, 1
        %v1435 = vor.u32 %v1430, %v1434
        %v1437 = vshll.u32 %v1267, 16
        %v1439 = vrot.slane %v1437, 1
        %v1440 = vsel %vm1272, %v1435, %v1439
        %v1442 = vshrl.u32 %v1248, 16
        %v1444 = vshll.u32 %v1248, 16
        %v1446 = vrot.slane %v1444, 1
        %v1447 = vor.u32 %v1442, %v1446
        %v1449 = vshll.u32 %v1268, 16
        %v1451 = vrot.slane %v1449, 1
        %v1452 = vsel %vm1272, %v1447, %v1451
        %v1454 = vshrl.u32 %v1249, 16
        %v1456 = vshll.u32 %v1249, 16
        %v1458 = vrot.slane %v1456, 1
        %v1459 = vor.u32 %v1454, %v1458
        %v1461 = vshll.u32 %v1269, 16
        %v1463 = vrot.slane %v1461, 1
        %v1464 = vsel %vm1272, %v1459, %v1463
        %1465 = vrot.lane.b32.xlu0 %v1284, 2
        %v1466 = vpop.permute.xlu0 %1465
        %1467 = vrot.lane.b32.xlu0 %v1296, 2
        %v1468 = vpop.permute.xlu0 %1467
        %1469 = vrot.lane.b32.xlu0 %v1308, 2
        %v1470 = vpop.permute.xlu0 %1469
        %1471 = vrot.lane.b32.xlu0 %v1320, 2
        %v1472 = vpop.permute.xlu0 %1471
        %1473 = vrot.lane.b32.xlu0 %v1332, 2
        %v1474 = vpop.permute.xlu0 %1473
        %1475 = vrot.lane.b32.xlu0 %v1344, 2
        %v1476 = vpop.permute.xlu0 %1475
        %1477 = vrot.lane.b32.xlu0 %v1356, 2
        %v1478 = vpop.permute.xlu0 %1477
        %1479 = vrot.lane.b32.xlu0 %v1368, 2
        %v1480 = vpop.permute.xlu0 %1479
        %1481 = vrot.lane.b32.xlu0 %v1380, 2
        %v1482 = vpop.permute.xlu0 %1481
        %1483 = vrot.lane.b32.xlu0 %v1392, 2
        %v1484 = vpop.permute.xlu0 %1483
        %1485 = vrot.lane.b32.xlu0 %v1404, 2
        %v1486 = vpop.permute.xlu0 %1485
        %1487 = vrot.lane.b32.xlu0 %v1416, 2
        %v1488 = vpop.permute.xlu0 %1487
        %1489 = vrot.lane.b32.xlu0 %v1428, 2
        %v1490 = vpop.permute.xlu0 %1489
        %1491 = vrot.lane.b32.xlu0 %v1440, 2
        %v1492 = vpop.permute.xlu0 %1491
        %1493 = vrot.lane.b32.xlu0 %v1452, 2
        %v1494 = vpop.permute.xlu0 %1493
        %1495 = vrot.lane.b32.xlu0 %v1464, 2
        %v1496 = vpop.permute.xlu0 %1495
        %vm1529 = vcmask 1046528
        %v1530 = vrot.slane %v1232, 1
        %v1531 = vrot.slane %v1252, 1
        %v1532 = vsel %vm1529, %v1530, %v1531
        %v1533 = vrot.slane %v1233, 1
        %v1534 = vrot.slane %v1253, 1
        %v1535 = vsel %vm1529, %v1533, %v1534
        %v1536 = vrot.slane %v1234, 1
        %v1537 = vrot.slane %v1254, 1
        %v1538 = vsel %vm1529, %v1536, %v1537
        %v1539 = vrot.slane %v1235, 1
        %v1540 = vrot.slane %v1255, 1
        %v1541 = vsel %vm1529, %v1539, %v1540
        %v1542 = vrot.slane %v1236, 1
        %v1543 = vrot.slane %v1256, 1
        %v1544 = vsel %vm1529, %v1542, %v1543
        %v1545 = vrot.slane %v1237, 1
        %v1546 = vrot.slane %v1257, 1
        %v1547 = vsel %vm1529, %v1545, %v1546
        %v1548 = vrot.slane %v1238, 1
        %v1549 = vrot.slane %v1258, 1
        %v1550 = vsel %vm1529, %v1548, %v1549
        %v1551 = vrot.slane %v1239, 1
        %v1552 = vrot.slane %v1259, 1
        %v1553 = vsel %vm1529, %v1551, %v1552
        %v1554 = vrot.slane %v1242, 1
        %v1555 = vrot.slane %v1262, 1
        %v1556 = vsel %vm1529, %v1554, %v1555
        %v1557 = vrot.slane %v1243, 1
        %v1558 = vrot.slane %v1263, 1
        %v1559 = vsel %vm1529, %v1557, %v1558
        %v1560 = vrot.slane %v1244, 1
        %v1561 = vrot.slane %v1264, 1
        %v1562 = vsel %vm1529, %v1560, %v1561
        %v1563 = vrot.slane %v1245, 1
        %v1564 = vrot.slane %v1265, 1
        %v1565 = vsel %vm1529, %v1563, %v1564
        %v1566 = vrot.slane %v1246, 1
        %v1567 = vrot.slane %v1266, 1
        %v1568 = vsel %vm1529, %v1566, %v1567
        %v1569 = vrot.slane %v1247, 1
        %v1570 = vrot.slane %v1267, 1
        %v1571 = vsel %vm1529, %v1569, %v1570
        %v1572 = vrot.slane %v1248, 1
        %v1573 = vrot.slane %v1268, 1
        %v1574 = vsel %vm1529, %v1572, %v1573
        %v1575 = vrot.slane %v1249, 1
        %v1576 = vrot.slane %v1269, 1
        %v1577 = vsel %vm1529, %v1575, %v1576
        %1578 = vrot.lane.b32.xlu0 %v1532, 4
        %v1579 = vpop.permute.xlu0 %1578
        %1580 = vrot.lane.b32.xlu0 %v1535, 4
        %v1581 = vpop.permute.xlu0 %1580
        %1582 = vrot.lane.b32.xlu0 %v1538, 4
        %v1583 = vpop.permute.xlu0 %1582
        %1584 = vrot.lane.b32.xlu0 %v1541, 4
        %v1585 = vpop.permute.xlu0 %1584
        %1586 = vrot.lane.b32.xlu0 %v1544, 4
        %v1587 = vpop.permute.xlu0 %1586
        %1588 = vrot.lane.b32.xlu0 %v1547, 4
        %v1589 = vpop.permute.xlu0 %1588
        %1590 = vrot.lane.b32.xlu0 %v1550, 4
        %v1591 = vpop.permute.xlu0 %1590
        %1592 = vrot.lane.b32.xlu0 %v1553, 4
        %v1593 = vpop.permute.xlu0 %1592
        %1594 = vrot.lane.b32.xlu0 %v1556, 4
        %v1595 = vpop.permute.xlu0 %1594
        %1596 = vrot.lane.b32.xlu0 %v1559, 4
        %v1597 = vpop.permute.xlu0 %1596
        %1598 = vrot.lane.b32.xlu0 %v1562, 4
        %v1599 = vpop.permute.xlu0 %1598
        %1600 = vrot.lane.b32.xlu0 %v1565, 4
        %v1601 = vpop.permute.xlu0 %1600
        %1602 = vrot.lane.b32.xlu0 %v1568, 4
        %v1603 = vpop.permute.xlu0 %1602
        %1604 = vrot.lane.b32.xlu0 %v1571, 4
        %v1605 = vpop.permute.xlu0 %1604
        %1606 = vrot.lane.b32.xlu0 %v1574, 4
        %v1607 = vpop.permute.xlu0 %1606
        %1608 = vrot.lane.b32.xlu0 %v1577, 4
        %v1609 = vpop.permute.xlu0 %1608
        %1612 = vrot.lane.b32.xlu0 %v1233, 6
        %v1613 = vpop.permute.xlu0 %1612
        %1614 = vrot.lane.b32.xlu0 %v1234, 6
        %v1615 = vpop.permute.xlu0 %1614
        %1616 = vrot.lane.b32.xlu0 %v1235, 6
        %v1617 = vpop.permute.xlu0 %1616
        %1618 = vrot.lane.b32.xlu0 %v1236, 6
        %v1619 = vpop.permute.xlu0 %1618
        %1620 = vrot.lane.b32.xlu0 %v1237, 6
        %v1621 = vpop.permute.xlu0 %1620
        %1622 = vrot.lane.b32.xlu0 %v1238, 6
        %v1623 = vpop.permute.xlu0 %1622
        %1624 = vrot.lane.b32.xlu0 %v1239, 6
        %v1625 = vpop.permute.xlu0 %1624
        %1626 = vrot.lane.b32.xlu0 %v1240, 6
        %v1627 = vpop.permute.xlu0 %1626
        %1628 = vrot.lane.b32.xlu0 %v1243, 6
        %v1629 = vpop.permute.xlu0 %1628
        %1630 = vrot.lane.b32.xlu0 %v1244, 6
        %v1631 = vpop.permute.xlu0 %1630
        %1632 = vrot.lane.b32.xlu0 %v1245, 6
        %v1633 = vpop.permute.xlu0 %1632
        %1634 = vrot.lane.b32.xlu0 %v1246, 6
        %v1635 = vpop.permute.xlu0 %1634
        %1636 = vrot.lane.b32.xlu0 %v1247, 6
        %v1637 = vpop.permute.xlu0 %1636
        %1638 = vrot.lane.b32.xlu0 %v1248, 6
        %v1639 = vpop.permute.xlu0 %1638
        %1640 = vrot.lane.b32.xlu0 %v1249, 6
        %v1641 = vpop.permute.xlu0 %1640
        %1642 = vrot.lane.b32.xlu0 %v1250, 6
        %v1643 = vpop.permute.xlu0 %1642
        %v1645 = vshrl.u32 %v1240, 16
        %v1647 = vshll.u32 %v1240, 16
        %v1649 = vrot.slane %v1647, 1
        %v1650 = vor.u32 %v1645, %v1649
        %v1652 = vshll.u32 %v1260, 16
        %v1654 = vrot.slane %v1652, 1
        %v1655 = vsel %vm1272, %v1650, %v1654
        %v1657 = vshrl.u32 %v1250, 16
        %v1659 = vshll.u32 %v1250, 16
        %v1661 = vrot.slane %v1659, 1
        %v1662 = vor.u32 %v1657, %v1661
        %v1664 = vshll.u32 %v1270, 16
        %v1666 = vrot.slane %v1664, 1
        %v1667 = vsel %vm1272, %v1662, %v1666
        %1668 = vrot.lane.b32.xlu0 %v1296, 8
        %v1669 = vpop.permute.xlu0 %1668
        %1670 = vrot.lane.b32.xlu0 %v1308, 8
        %v1671 = vpop.permute.xlu0 %1670
        %1672 = vrot.lane.b32.xlu0 %v1320, 8
        %v1673 = vpop.permute.xlu0 %1672
        %1674 = vrot.lane.b32.xlu0 %v1332, 8
        %v1675 = vpop.permute.xlu0 %1674
        %1676 = vrot.lane.b32.xlu0 %v1344, 8
        %v1677 = vpop.permute.xlu0 %1676
        %1678 = vrot.lane.b32.xlu0 %v1356, 8
        %v1679 = vpop.permute.xlu0 %1678
        %1680 = vrot.lane.b32.xlu0 %v1368, 8
        %v1681 = vpop.permute.xlu0 %1680
        %1682 = vrot.lane.b32.xlu0 %v1655, 8
        %v1683 = vpop.permute.xlu0 %1682
        %1684 = vrot.lane.b32.xlu0 %v1392, 8
        %v1685 = vpop.permute.xlu0 %1684
        %1686 = vrot.lane.b32.xlu0 %v1404, 8
        %v1687 = vpop.permute.xlu0 %1686
        %1688 = vrot.lane.b32.xlu0 %v1416, 8
        %v1689 = vpop.permute.xlu0 %1688
        %1690 = vrot.lane.b32.xlu0 %v1428, 8
        %v1691 = vpop.permute.xlu0 %1690
        %1692 = vrot.lane.b32.xlu0 %v1440, 8
        %v1693 = vpop.permute.xlu0 %1692
        %1694 = vrot.lane.b32.xlu0 %v1452, 8
        %v1695 = vpop.permute.xlu0 %1694
        %1696 = vrot.lane.b32.xlu0 %v1464, 8
        %v1697 = vpop.permute.xlu0 %1696
        %1698 = vrot.lane.b32.xlu0 %v1667, 8
        %v1699 = vpop.permute.xlu0 %1698
        %v1702 = vrot.slane %v1240, 1
        %v1703 = vrot.slane %v1260, 1
        %v1704 = vsel %vm1529, %v1702, %v1703
        %v1705 = vrot.slane %v1250, 1
        %v1706 = vrot.slane %v1270, 1
        %v1707 = vsel %vm1529, %v1705, %v1706
        %1708 = vrot.lane.b32.xlu0 %v1535, 10
        %v1709 = vpop.permute.xlu0 %1708
        %1710 = vrot.lane.b32.xlu0 %v1538, 10
        %v1711 = vpop.permute.xlu0 %1710
        %1712 = vrot.lane.b32.xlu0 %v1541, 10
        %v1713 = vpop.permute.xlu0 %1712
        %1714 = vrot.lane.b32.xlu0 %v1544, 10
        %v1715 = vpop.permute.xlu0 %1714
        %1716 = vrot.lane.b32.xlu0 %v1547, 10
        %v1717 = vpop.permute.xlu0 %1716
        %1718 = vrot.lane.b32.xlu0 %v1550, 10
        %v1719 = vpop.permute.xlu0 %1718
        %1720 = vrot.lane.b32.xlu0 %v1553, 10
        %v1721 = vpop.permute.xlu0 %1720
        %1722 = vrot.lane.b32.xlu0 %v1704, 10
        %v1723 = vpop.permute.xlu0 %1722
        %1724 = vrot.lane.b32.xlu0 %v1559, 10
        %v1725 = vpop.permute.xlu0 %1724
        %1726 = vrot.lane.b32.xlu0 %v1562, 10
        %v1727 = vpop.permute.xlu0 %1726
        %1728 = vrot.lane.b32.xlu0 %v1565, 10
        %v1729 = vpop.permute.xlu0 %1728
        %1730 = vrot.lane.b32.xlu0 %v1568, 10
        %v1731 = vpop.permute.xlu0 %1730
        %1732 = vrot.lane.b32.xlu0 %v1571, 10
        %v1733 = vpop.permute.xlu0 %1732
        %1734 = vrot.lane.b32.xlu0 %v1574, 10
        %v1735 = vpop.permute.xlu0 %1734
        %1736 = vrot.lane.b32.xlu0 %v1577, 10
        %v1737 = vpop.permute.xlu0 %1736
        %1738 = vrot.lane.b32.xlu0 %v1707, 10
        %v1739 = vpop.permute.xlu0 %1738
        %1742 = vrot.lane.b32.xlu0 %v1234, 12
        %v1743 = vpop.permute.xlu0 %1742
        %1744 = vrot.lane.b32.xlu0 %v1235, 12
        %v1745 = vpop.permute.xlu0 %1744
        %1746 = vrot.lane.b32.xlu0 %v1236, 12
        %v1747 = vpop.permute.xlu0 %1746
        %1748 = vrot.lane.b32.xlu0 %v1237, 12
        %v1749 = vpop.permute.xlu0 %1748
        %1750 = vrot.lane.b32.xlu0 %v1238, 12
        %v1751 = vpop.permute.xlu0 %1750
        %1752 = vrot.lane.b32.xlu0 %v1239, 12
        %v1753 = vpop.permute.xlu0 %1752
        %1754 = vrot.lane.b32.xlu0 %v1240, 12
        %v1755 = vpop.permute.xlu0 %1754
        %1756 = vrot.lane.b32.xlu0 %v1241, 12
        %v1757 = vpop.permute.xlu0 %1756
        %1758 = vrot.lane.b32.xlu0 %v1244, 12
        %v1759 = vpop.permute.xlu0 %1758
        %1760 = vrot.lane.b32.xlu0 %v1245, 12
        %v1761 = vpop.permute.xlu0 %1760
        %1762 = vrot.lane.b32.xlu0 %v1246, 12
        %v1763 = vpop.permute.xlu0 %1762
        %1764 = vrot.lane.b32.xlu0 %v1247, 12
        %v1765 = vpop.permute.xlu0 %1764
        %1766 = vrot.lane.b32.xlu0 %v1248, 12
        %v1767 = vpop.permute.xlu0 %1766
        %1768 = vrot.lane.b32.xlu0 %v1249, 12
        %v1769 = vpop.permute.xlu0 %1768
        %1770 = vrot.lane.b32.xlu0 %v1250, 12
        %v1771 = vpop.permute.xlu0 %1770
        %1772 = vrot.lane.b32.xlu0 %v1251, 12
        %v1773 = vpop.permute.xlu0 %1772
        %v1775 = vshrl.u32 %v1241, 16
        %v1777 = vshll.u32 %v1241, 16
        %v1779 = vrot.slane %v1777, 1
        %v1780 = vor.u32 %v1775, %v1779
        %v1782 = vshll.u32 %v1261, 16
        %v1784 = vrot.slane %v1782, 1
        %v1785 = vsel %vm1272, %v1780, %v1784
        %v1787 = vshrl.u32 %v1251, 16
        %v1789 = vshll.u32 %v1251, 16
        %v1791 = vrot.slane %v1789, 1
        %v1792 = vor.u32 %v1787, %v1791
        %v1794 = vshll.u32 %v1271, 16
        %v1796 = vrot.slane %v1794, 1
        %v1797 = vsel %vm1272, %v1792, %v1796
        %1798 = vrot.lane.b32.xlu0 %v1308, 14
        %v1799 = vpop.permute.xlu0 %1798
        %1800 = vrot.lane.b32.xlu0 %v1320, 14
        %v1801 = vpop.permute.xlu0 %1800
        %1802 = vrot.lane.b32.xlu0 %v1332, 14
        %v1803 = vpop.permute.xlu0 %1802
        %1804 = vrot.lane.b32.xlu0 %v1344, 14
        %v1805 = vpop.permute.xlu0 %1804
        %1806 = vrot.lane.b32.xlu0 %v1356, 14
        %v1807 = vpop.permute.xlu0 %1806
        %1808 = vrot.lane.b32.xlu0 %v1368, 14
        %v1809 = vpop.permute.xlu0 %1808
        %1810 = vrot.lane.b32.xlu0 %v1655, 14
        %v1811 = vpop.permute.xlu0 %1810
        %1812 = vrot.lane.b32.xlu0 %v1785, 14
        %v1813 = vpop.permute.xlu0 %1812
        %1814 = vrot.lane.b32.xlu0 %v1404, 14
        %v1815 = vpop.permute.xlu0 %1814
        %1816 = vrot.lane.b32.xlu0 %v1416, 14
        %v1817 = vpop.permute.xlu0 %1816
        %1818 = vrot.lane.b32.xlu0 %v1428, 14
        %v1819 = vpop.permute.xlu0 %1818
        %1820 = vrot.lane.b32.xlu0 %v1440, 14
        %v1821 = vpop.permute.xlu0 %1820
        %1822 = vrot.lane.b32.xlu0 %v1452, 14
        %v1823 = vpop.permute.xlu0 %1822
        %1824 = vrot.lane.b32.xlu0 %v1464, 14
        %v1825 = vpop.permute.xlu0 %1824
        %1826 = vrot.lane.b32.xlu0 %v1667, 14
        %v1827 = vpop.permute.xlu0 %1826
        %1828 = vrot.lane.b32.xlu0 %v1797, 14
        %v1829 = vpop.permute.xlu0 %1828
        %v1832 = vrot.slane %v1241, 1
        %v1833 = vrot.slane %v1261, 1
        %v1834 = vsel %vm1529, %v1832, %v1833
        %v1835 = vrot.slane %v1251, 1
        %v1836 = vrot.slane %v1271, 1
        %v1837 = vsel %vm1529, %v1835, %v1836
        %1838 = vrot.lane.b32.xlu0 %v1538, 16
        %v1839 = vpop.permute.xlu0 %1838
        %1840 = vrot.lane.b32.xlu0 %v1541, 16
        %v1841 = vpop.permute.xlu0 %1840
        %1842 = vrot.lane.b32.xlu0 %v1544, 16
        %v1843 = vpop.permute.xlu0 %1842
        %1844 = vrot.lane.b32.xlu0 %v1547, 16
        %v1845 = vpop.permute.xlu0 %1844
        %1846 = vrot.lane.b32.xlu0 %v1550, 16
        %v1847 = vpop.permute.xlu0 %1846
        %1848 = vrot.lane.b32.xlu0 %v1553, 16
        %v1849 = vpop.permute.xlu0 %1848
        %1850 = vrot.lane.b32.xlu0 %v1704, 16
        %v1851 = vpop.permute.xlu0 %1850
        %1852 = vrot.lane.b32.xlu0 %v1834, 16
        %v1853 = vpop.permute.xlu0 %1852
        %1854 = vrot.lane.b32.xlu0 %v1562, 16
        %v1855 = vpop.permute.xlu0 %1854
        %1856 = vrot.lane.b32.xlu0 %v1565, 16
        %v1857 = vpop.permute.xlu0 %1856
        %1858 = vrot.lane.b32.xlu0 %v1568, 16
        %v1859 = vpop.permute.xlu0 %1858
        %1860 = vrot.lane.b32.xlu0 %v1571, 16
        %v1861 = vpop.permute.xlu0 %1860
        %1862 = vrot.lane.b32.xlu0 %v1574, 16
        %v1863 = vpop.permute.xlu0 %1862
        %1864 = vrot.lane.b32.xlu0 %v1577, 16
        %v1865 = vpop.permute.xlu0 %1864
        %1866 = vrot.lane.b32.xlu0 %v1707, 16
        %v1867 = vpop.permute.xlu0 %1866
        %1868 = vrot.lane.b32.xlu0 %v1837, 16
        %v1869 = vpop.permute.xlu0 %1868
        %v1871 = vsel %vm851, %v1232, %v1466
        %v1873 = vsel %vm851, %v1233, %v1468
        %v1875 = vsel %vm851, %v1234, %v1470
        %v1877 = vsel %vm851, %v1235, %v1472
        %v1879 = vsel %vm851, %v1236, %v1474
        %v1881 = vsel %vm851, %v1237, %v1476
        %v1883 = vsel %vm851, %v1238, %v1478
        %v1885 = vsel %vm851, %v1239, %v1480
        %v1887 = vsel %vm851, %v1242, %v1482
        %v1889 = vsel %vm851, %v1243, %v1484
        %v1891 = vsel %vm851, %v1244, %v1486
        %v1893 = vsel %vm851, %v1245, %v1488
        %v1895 = vsel %vm851, %v1246, %v1490
        %v1897 = vsel %vm851, %v1247, %v1492
        %v1899 = vsel %vm851, %v1248, %v1494
        %v1901 = vsel %vm851, %v1249, %v1496
        %v1903 = vsel %vm432, %v1871, %v1579
        %v1905 = vsel %vm432, %v1873, %v1581
        %v1907 = vsel %vm432, %v1875, %v1583
        %v1909 = vsel %vm432, %v1877, %v1585
        %v1911 = vsel %vm432, %v1879, %v1587
        %v1913 = vsel %vm432, %v1881, %v1589
        %v1915 = vsel %vm432, %v1883, %v1591
        %v1917 = vsel %vm432, %v1885, %v1593
        %v1919 = vsel %vm432, %v1887, %v1595
        %v1921 = vsel %vm432, %v1889, %v1597
        %v1923 = vsel %vm432, %v1891, %v1599
        %v1925 = vsel %vm432, %v1893, %v1601
        %v1927 = vsel %vm432, %v1895, %v1603
        %v1929 = vsel %vm432, %v1897, %v1605
        %v1931 = vsel %vm432, %v1899, %v1607
        %v1933 = vsel %vm432, %v1901, %v1609
        %vm1934 = vcmask 48128
        %v1936 = vsel %vm1934, %v1903, %v1613
        %v1938 = vsel %vm1934, %v1905, %v1615
        %v1940 = vsel %vm1934, %v1907, %v1617
        %v1942 = vsel %vm1934, %v1909, %v1619
        %v1944 = vsel %vm1934, %v1911, %v1621
        %v1946 = vsel %vm1934, %v1913, %v1623
        %v1948 = vsel %vm1934, %v1915, %v1625
        %v1950 = vsel %vm1934, %v1917, %v1627
        %v1952 = vsel %vm1934, %v1919, %v1629
        %v1954 = vsel %vm1934, %v1921, %v1631
        %v1956 = vsel %vm1934, %v1923, %v1633
        %v1958 = vsel %vm1934, %v1925, %v1635
        %v1960 = vsel %vm1934, %v1927, %v1637
        %v1962 = vsel %vm1934, %v1929, %v1639
        %v1964 = vsel %vm1934, %v1931, %v1641
        %v1966 = vsel %vm1934, %v1933, %v1643
        %vm1967 = vcmask 64512
        %v1969 = vsel %vm1967, %v1936, %v1669
        %v1971 = vsel %vm1967, %v1938, %v1671
        %v1973 = vsel %vm1967, %v1940, %v1673
        %v1975 = vsel %vm1967, %v1942, %v1675
        %v1977 = vsel %vm1967, %v1944, %v1677
        %v1979 = vsel %vm1967, %v1946, %v1679
        %v1981 = vsel %vm1967, %v1948, %v1681
        %v1983 = vsel %vm1967, %v1950, %v1683
        %v1985 = vsel %vm1967, %v1952, %v1685
        %v1987 = vsel %vm1967, %v1954, %v1687
        %v1989 = vsel %vm1967, %v1956, %v1689
        %v1991 = vsel %vm1967, %v1958, %v1691
        %v1993 = vsel %vm1967, %v1960, %v1693
        %v1995 = vsel %vm1967, %v1962, %v1695
        %v1997 = vsel %vm1967, %v1964, %v1697
        %v1999 = vsel %vm1967, %v1966, %v1699
        %vm2000 = vcmask 80896
        %v2002 = vsel %vm2000, %v1969, %v1709
        %v2004 = vsel %vm2000, %v1971, %v1711
        %v2006 = vsel %vm2000, %v1973, %v1713
        %v2008 = vsel %vm2000, %v1975, %v1715
        %v2010 = vsel %vm2000, %v1977, %v1717
        %v2012 = vsel %vm2000, %v1979, %v1719
        %v2014 = vsel %vm2000, %v1981, %v1721
        %v2016 = vsel %vm2000, %v1983, %v1723
        %v2018 = vsel %vm2000, %v1985, %v1725
        %v2020 = vsel %vm2000, %v1987, %v1727
        %v2022 = vsel %vm2000, %v1989, %v1729
        %v2024 = vsel %vm2000, %v1991, %v1731
        %v2026 = vsel %vm2000, %v1993, %v1733
        %v2028 = vsel %vm2000, %v1995, %v1735
        %v2030 = vsel %vm2000, %v1997, %v1737
        %v2032 = vsel %vm2000, %v1999, %v1739
        %vm2033 = vcmask 97280
        %v2035 = vsel %vm2033, %v2002, %v1743
        %v2037 = vsel %vm2033, %v2004, %v1745
        %v2039 = vsel %vm2033, %v2006, %v1747
        %v2041 = vsel %vm2033, %v2008, %v1749
        %v2043 = vsel %vm2033, %v2010, %v1751
        %v2045 = vsel %vm2033, %v2012, %v1753
        %v2047 = vsel %vm2033, %v2014, %v1755
        %v2049 = vsel %vm2033, %v2016, %v1757
        %v2051 = vsel %vm2033, %v2018, %v1759
        %v2053 = vsel %vm2033, %v2020, %v1761
        %v2055 = vsel %vm2033, %v2022, %v1763
        %v2057 = vsel %vm2033, %v2024, %v1765
        %v2059 = vsel %vm2033, %v2026, %v1767
        %v2061 = vsel %vm2033, %v2028, %v1769
        %v2063 = vsel %vm2033, %v2030, %v1771
        %v2065 = vsel %vm2033, %v2032, %v1773
        %vm2066 = vcmask 113664
        %v2068 = vsel %vm2066, %v2035, %v1799
        %v2070 = vsel %vm2066, %v2037, %v1801
        %v2072 = vsel %vm2066, %v2039, %v1803
        %v2074 = vsel %vm2066, %v2041, %v1805
        %v2076 = vsel %vm2066, %v2043, %v1807
        %v2078 = vsel %vm2066, %v2045, %v1809
        %v2080 = vsel %vm2066, %v2047, %v1811
        %v2082 = vsel %vm2066, %v2049, %v1813
        %v2084 = vsel %vm2066, %v2051, %v1815
        %v2086 = vsel %vm2066, %v2053, %v1817
        %v2088 = vsel %vm2066, %v2055, %v1819
        %v2090 = vsel %vm2066, %v2057, %v1821
        %v2092 = vsel %vm2066, %v2059, %v1823
        %v2094 = vsel %vm2066, %v2061, %v1825
        %v2096 = vsel %vm2066, %v2063, %v1827
        %v2098 = vsel %vm2066, %v2065, %v1829
        %vm2099 = vcmask 130048
        %v2101 = vsel %vm2099, %v2068, %v1839
        %v2103 = vsel %vm2099, %v2070, %v1841
        %v2105 = vsel %vm2099, %v2072, %v1843
        %v2107 = vsel %vm2099, %v2074, %v1845
        %v2109 = vsel %vm2099, %v2076, %v1847
        %v2111 = vsel %vm2099, %v2078, %v1849
        %v2113 = vsel %vm2099, %v2080, %v1851
        %v2115 = vsel %vm2099, %v2082, %v1853
        %v2117 = vsel %vm2099, %v2084, %v1855
        %v2119 = vsel %vm2099, %v2086, %v1857
        %v2121 = vsel %vm2099, %v2088, %v1859
        %v2123 = vsel %vm2099, %v2090, %v1861
        %v2125 = vsel %vm2099, %v2092, %v1863
        %v2127 = vsel %vm2099, %v2094, %v1865
        %v2129 = vsel %vm2099, %v2096, %v1867
        %v2131 = vsel %vm2099, %v2098, %v1869
        %v2132 = vld [vmem:[%s4] sm:$0xf]
        %v2133 = vld [vmem:[%s4 + $0x4] sm:$0xf]
        %v2134 = vld [vmem:[%s4 + $0x8] sm:$0x1]
        %v2138 = vunpack.c.l.b16 %v2132
        %v2139 = vunpack.c.l.b16 %v2133
        %v2140 = vunpack.c.l.b16 %v2134
        %v2141 = vpack.c.b16 %v2139, %v2138
        %v2142 = vpack.c.b16 %v2140, %v2140
        %vm2144 = vcmask 146432
        %v2145 = vsel %vm2144, %v2101, 0
        %v2147 = vsel %vm2144, %v2103, 0
        %v2149 = vsel %vm2144, %v2105, 0
        %v2151 = vsel %vm2144, %v2107, 0
        %v2153 = vsel %vm2144, %v2109, 0
        %v2155 = vsel %vm2144, %v2111, 0
        %v2157 = vsel %vm2144, %v2113, 0
        %v2159 = vsel %vm2144, %v2115, 0
        %v2161 = vsel %vm2144, %v2117, 0
        %v2163 = vsel %vm2144, %v2119, 0
        %v2165 = vsel %vm2144, %v2121, 0
        %v2167 = vsel %vm2144, %v2123, 0
        %v2169 = vsel %vm2144, %v2125, 0
        %v2171 = vsel %vm2144, %v2127, 0
        %v2173 = vsel %vm2144, %v2129, 0
        %v2175 = vsel %vm2144, %v2131, 0
        %v2178 = vsel %vm900, %v2142, 0
        %2180 = vmatprep.subr.bf16.mxu0 0
        %2181 = vmatpush1.bf16.msra.mxu0 %v2141
        %2182 = vmatprep.subr.bf16.mxu0 0
        %2183 = vmatpush1.bf16.msra.mxu0 %v2178
        %2184 = vmatprep.subr.bf16.mxu0 0
        %2185 = vmatpush1.bf16.msra.mxu0 0
        %2186 = vmatprep.subr.bf16.mxu0 0
        %2187 = vmatpush1.bf16.msra.mxu0 0
        %2188 = vmatprep.subr.bf16.mxu0 0
        %2189 = vmatpush1.bf16.msra.mxu0 0
        %2190 = vmatprep.subr.bf16.mxu0 0
        %2191 = vmatpush1.bf16.msra.mxu0 0
        %2192 = vmatprep.subr.bf16.mxu0 0
        %2193 = vmatpush1.bf16.msra.mxu0 0
        %2194 = vmatprep.subr.bf16.mxu0 0
        %2195 = vmatpush1.bf16.msra.mxu0 0
        %2196 = vmatprep.subr.bf16.mxu0 0
        %2197 = vmatpush1.bf16.msra.mxu0 0
        %2198 = vmatprep.subr.bf16.mxu0 0
        %2199 = vmatpush1.bf16.msra.mxu0 0
        %2200 = vmatprep.subr.bf16.mxu0 0
        %2201 = vmatpush1.bf16.msra.mxu0 0
        %2202 = vmatprep.subr.bf16.mxu0 0
        %2203 = vmatpush1.bf16.msra.mxu0 0
        %2204 = vmatprep.subr.bf16.mxu0 0
        %2205 = vmatpush1.bf16.msra.mxu0 0
        %2206 = vmatprep.subr.bf16.mxu0 0
        %2207 = vmatpush1.bf16.msra.mxu0 0
        %2208 = vmatprep.subr.bf16.mxu0 0
        %2209 = vmatpush1.bf16.msra.mxu0 0
        %2210 = vmatprep.subr.bf16.mxu0 0
        %2211 = vmatpush1.bf16.msra.mxu0 0
        %2212 = vmatprep.mubr.bf16.mxu0 0
        %2213 = vmatmul.mubr.bf16.gmra.mrb[0].mxu0 %v2145
        %v2214 = vpop.f32.mrb[0].mxu0
        %v2215 = vadd.f32 0.0, %v2214
        %v2216 = vpop.f32.mrb[0].mxu0
        %v2217 = vpop.f32.mrb[0].mxu0
        %v2218 = vadd.f32 0.0, %v2217
        %v2219 = vpop.f32.mrb[0].mxu0
        %2220 = vmatprep.mubr.bf16.mxu0 0
        %2221 = vmatmul.mubr.bf16.gmra.mrb[0].mxu0 %v2147
        %v2222 = vpop.f32.mrb[0].mxu0
        %v2223 = vadd.f32 0.0, %v2222
        %v2224 = vpop.f32.mrb[0].mxu0
        %v2225 = vpop.f32.mrb[0].mxu0
        %v2226 = vadd.f32 0.0, %v2225
        %v2227 = vpop.f32.mrb[0].mxu0
        %2228 = vmatprep.mubr.bf16.mxu0 0
        %2229 = vmatmul.mubr.bf16.gmra.mrb[0].mxu0 %v2149
        %v2230 = vpop.f32.mrb[0].mxu0
        %v2231 = vadd.f32 0.0, %v2230
        %v2232 = vpop.f32.mrb[0].mxu0
        %v2233 = vpop.f32.mrb[0].mxu0
        %v2234 = vadd.f32 0.0, %v2233
        %v2235 = vpop.f32.mrb[0].mxu0
        %2236 = vmatprep.mubr.bf16.mxu0 0
        %2237 = vmatmul.mubr.bf16.gmra.mrb[0].mxu0 %v2151
        %v2238 = vpop.f32.mrb[0].mxu0
        %v2239 = vadd.f32 0.0, %v2238
        %v2240 = vpop.f32.mrb[0].mxu0
        %v2241 = vpop.f32.mrb[0].mxu0
        %v2242 = vadd.f32 0.0, %v2241
        %v2243 = vpop.f32.mrb[0].mxu0
        %2244 = vmatprep.mubr.bf16.mxu0 0
        %2245 = vmatmul.mubr.bf16.gmra.mrb[0].mxu0 %v2153
        %v2246 = vpop.f32.mrb[0].mxu0
        %v2247 = vadd.f32 0.0, %v2246
        %v2248 = vpop.f32.mrb[0].mxu0
        %v2249 = vpop.f32.mrb[0].mxu0
        %v2250 = vadd.f32 0.0, %v2249
        %v2251 = vpop.f32.mrb[0].mxu0
        %2252 = vmatprep.mubr.bf16.mxu0 0
        %2253 = vmatmul.mubr.bf16.gmra.mrb[0].mxu0 %v2155
        %v2254 = vpop.f32.mrb[0].mxu0
        %v2255 = vadd.f32 0.0, %v2254
        %v2256 = vpop.f32.mrb[0].mxu0
        %v2257 = vpop.f32.mrb[0].mxu0
        %v2258 = vadd.f32 0.0, %v2257
        %v2259 = vpop.f32.mrb[0].mxu0
        %2260 = vmatprep.mubr.bf16.mxu0 0
        %2261 = vmatmul.mubr.bf16.gmra.mrb[0].mxu0 %v2157
        %v2262 = vpop.f32.mrb[0].mxu0
        %v2263 = vadd.f32 0.0, %v2262
        %v2264 = vpop.f32.mrb[0].mxu0
        %v2265 = vpop.f32.mrb[0].mxu0
        %v2266 = vadd.f32 0.0, %v2265
        %v2267 = vpop.f32.mrb[0].mxu0
        %2268 = vmatprep.mubr.bf16.mxu0 0
        %2269 = vmatmul.mubr.bf16.gmra.mrb[0].mxu0 %v2159
        %v2270 = vpop.f32.mrb[0].mxu0
        %v2271 = vadd.f32 0.0, %v2270
        %v2272 = vpop.f32.mrb[0].mxu0
        %v2273 = vpop.f32.mrb[0].mxu0
        %v2274 = vadd.f32 0.0, %v2273
        %v2275 = vpop.f32.mrb[0].mxu0
        %2276 = vmatprep.mubr.bf16.mxu0 0
        %2277 = vmatmul.mubr.bf16.gmra.mrb[0].mxu0 %v2161
        %v2278 = vpop.f32.mrb[0].mxu0
        %v2279 = vadd.f32 0.0, %v2278
        %v2280 = vpop.f32.mrb[0].mxu0
        %v2281 = vpop.f32.mrb[0].mxu0
        %v2282 = vadd.f32 0.0, %v2281
        %v2283 = vpop.f32.mrb[0].mxu0
        %2284 = vmatprep.mubr.bf16.mxu0 0
        %2285 = vmatmul.mubr.bf16.gmra.mrb[0].mxu0 %v2163
        %v2286 = vpop.f32.mrb[0].mxu0
        %v2287 = vadd.f32 0.0, %v2286
        %v2288 = vpop.f32.mrb[0].mxu0
        %v2289 = vpop.f32.mrb[0].mxu0
        %v2290 = vadd.f32 0.0, %v2289
        %v2291 = vpop.f32.mrb[0].mxu0
        %2292 = vmatprep.mubr.bf16.mxu0 0
        %2293 = vmatmul.mubr.bf16.gmra.mrb[0].mxu0 %v2165
        %v2294 = vpop.f32.mrb[0].mxu0
        %v2295 = vadd.f32 0.0, %v2294
        %v2296 = vpop.f32.mrb[0].mxu0
        %v2297 = vpop.f32.mrb[0].mxu0
        %v2298 = vadd.f32 0.0, %v2297
        %v2299 = vpop.f32.mrb[0].mxu0
        %2300 = vmatprep.mubr.bf16.mxu0 0
        %2301 = vmatmul.mubr.bf16.gmra.mrb[0].mxu0 %v2167
        %v2302 = vpop.f32.mrb[0].mxu0
        %v2303 = vadd.f32 0.0, %v2302
        %v2304 = vpop.f32.mrb[0].mxu0
        %v2305 = vpop.f32.mrb[0].mxu0
        %v2306 = vadd.f32 0.0, %v2305
        %v2307 = vpop.f32.mrb[0].mxu0
        %2308 = vmatprep.mubr.bf16.mxu0 0
        %2309 = vmatmul.mubr.bf16.gmra.mrb[0].mxu0 %v2169
        %v2310 = vpop.f32.mrb[0].mxu0
        %v2311 = vadd.f32 0.0, %v2310
        %v2312 = vpop.f32.mrb[0].mxu0
        %v2313 = vpop.f32.mrb[0].mxu0
        %v2314 = vadd.f32 0.0, %v2313
        %v2315 = vpop.f32.mrb[0].mxu0
        %2316 = vmatprep.mubr.bf16.mxu0 0
        %2317 = vmatmul.mubr.bf16.gmra.mrb[0].mxu0 %v2171
        %v2318 = vpop.f32.mrb[0].mxu0
        %v2319 = vadd.f32 0.0, %v2318
        %v2320 = vpop.f32.mrb[0].mxu0
        %v2321 = vpop.f32.mrb[0].mxu0
        %v2322 = vadd.f32 0.0, %v2321
        %v2323 = vpop.f32.mrb[0].mxu0
        %2324 = vmatprep.mubr.bf16.mxu0 0
        %2325 = vmatmul.mubr.bf16.gmra.mrb[0].mxu0 %v2173
        %v2326 = vpop.f32.mrb[0].mxu0
        %v2327 = vadd.f32 0.0, %v2326
        %v2328 = vpop.f32.mrb[0].mxu0
        %v2329 = vpop.f32.mrb[0].mxu0
        %v2330 = vadd.f32 0.0, %v2329
        %v2331 = vpop.f32.mrb[0].mxu0
        %2332 = vmatprep.mubr.bf16.mxu0 0
        %2333 = vmatmul.mubr.bf16.gmra.mrb[0].mxu0 %v2175
        %v2334 = vpop.f32.mrb[0].mxu0
        %v2335 = vadd.f32 0.0, %v2334
        %v2336 = vpop.f32.mrb[0].mxu0
        %v2337 = vpop.f32.mrb[0].mxu0
        %v2338 = vadd.f32 0.0, %v2337
        %v2339 = vpop.f32.mrb[0].mxu0
        %2340 = vdwg.mxu0
        %2373 = vrot.lane.b32.xlu0 %v2215, 4
        %v2374 = vpop.permute.xlu0 %2373
        %2375 = vrot.lane.b32.xlu0 %v2218, 4
        %v2376 = vpop.permute.xlu0 %2375
        %2377 = vrot.lane.b32.xlu0 %v2223, 4
        %v2378 = vpop.permute.xlu0 %2377
        %2379 = vrot.lane.b32.xlu0 %v2226, 4
        %v2380 = vpop.permute.xlu0 %2379
        %2381 = vrot.lane.b32.xlu0 %v2231, 4
        %v2382 = vpop.permute.xlu0 %2381
        %2383 = vrot.lane.b32.xlu0 %v2234, 4
        %v2384 = vpop.permute.xlu0 %2383
        %2385 = vrot.lane.b32.xlu0 %v2239, 4
        %v2386 = vpop.permute.xlu0 %2385
        %2387 = vrot.lane.b32.xlu0 %v2242, 4
        %v2388 = vpop.permute.xlu0 %2387
        %2389 = vrot.lane.b32.xlu0 %v2247, 4
        %v2390 = vpop.permute.xlu0 %2389
        %2391 = vrot.lane.b32.xlu0 %v2250, 4
        %v2392 = vpop.permute.xlu0 %2391
        %2393 = vrot.lane.b32.xlu0 %v2255, 4
        %v2394 = vpop.permute.xlu0 %2393
        %2395 = vrot.lane.b32.xlu0 %v2258, 4
        %v2396 = vpop.permute.xlu0 %2395
        %2397 = vrot.lane.b32.xlu0 %v2263, 4
        %v2398 = vpop.permute.xlu0 %2397
        %2399 = vrot.lane.b32.xlu0 %v2266, 4
        %v2400 = vpop.permute.xlu0 %2399
        %2401 = vrot.lane.b32.xlu0 %v2271, 4
        %v2402 = vpop.permute.xlu0 %2401
        %2403 = vrot.lane.b32.xlu0 %v2274, 4
        %v2404 = vpop.permute.xlu0 %2403
        %2405 = vrot.lane.b32.xlu0 %v2279, 4
        %v2406 = vpop.permute.xlu0 %2405
        %2407 = vrot.lane.b32.xlu0 %v2282, 4
        %v2408 = vpop.permute.xlu0 %2407
        %2409 = vrot.lane.b32.xlu0 %v2287, 4
        %v2410 = vpop.permute.xlu0 %2409
        %2411 = vrot.lane.b32.xlu0 %v2290, 4
        %v2412 = vpop.permute.xlu0 %2411
        %2413 = vrot.lane.b32.xlu0 %v2295, 4
        %v2414 = vpop.permute.xlu0 %2413
        %2415 = vrot.lane.b32.xlu0 %v2298, 4
        %v2416 = vpop.permute.xlu0 %2415
        %2417 = vrot.lane.b32.xlu0 %v2303, 4
        %v2418 = vpop.permute.xlu0 %2417
        %2419 = vrot.lane.b32.xlu0 %v2306, 4
        %v2420 = vpop.permute.xlu0 %2419
        %2421 = vrot.lane.b32.xlu0 %v2311, 4
        %v2422 = vpop.permute.xlu0 %2421
        %2423 = vrot.lane.b32.xlu0 %v2314, 4
        %v2424 = vpop.permute.xlu0 %2423
        %2425 = vrot.lane.b32.xlu0 %v2319, 4
        %v2426 = vpop.permute.xlu0 %2425
        %2427 = vrot.lane.b32.xlu0 %v2322, 4
        %v2428 = vpop.permute.xlu0 %2427
        %2429 = vrot.lane.b32.xlu0 %v2327, 4
        %v2430 = vpop.permute.xlu0 %2429
        %2431 = vrot.lane.b32.xlu0 %v2330, 4
        %v2432 = vpop.permute.xlu0 %2431
        %2433 = vrot.lane.b32.xlu0 %v2335, 4
        %v2434 = vpop.permute.xlu0 %2433
        %2435 = vrot.lane.b32.xlu0 %v2338, 4
        %v2436 = vpop.permute.xlu0 %2435
        %v2469 = vsel %vm432, %v939, %v2374
        %v2470 = vsel %vm432, %v942, %v2376
        %v2471 = vsel %vm432, %v947, %v2378
        %v2472 = vsel %vm432, %v950, %v2380
        %v2473 = vsel %vm432, %v955, %v2382
        %v2474 = vsel %vm432, %v958, %v2384
        %v2475 = vsel %vm432, %v963, %v2386
        %v2476 = vsel %vm432, %v966, %v2388
        %v2477 = vsel %vm432, %v971, %v2390
        %v2478 = vsel %vm432, %v974, %v2392
        %v2479 = vsel %vm432, %v979, %v2394
        %v2480 = vsel %vm432, %v982, %v2396
        %v2481 = vsel %vm432, %v987, %v2398
        %v2482 = vsel %vm432, %v990, %v2400
        %v2483 = vsel %vm432, %v995, %v2402
        %v2484 = vsel %vm432, %v998, %v2404
        %v2485 = vsel %vm432, %v1003, %v2406
        %v2486 = vsel %vm432, %v1006, %v2408
        %v2487 = vsel %vm432, %v1011, %v2410
        %v2488 = vsel %vm432, %v1014, %v2412
        %v2489 = vsel %vm432, %v1019, %v2414
        %v2490 = vsel %vm432, %v1022, %v2416
        %v2491 = vsel %vm432, %v1027, %v2418
        %v2492 = vsel %vm432, %v1030, %v2420
        %v2493 = vsel %vm432, %v1035, %v2422
        %v2494 = vsel %vm432, %v1038, %v2424
        %v2495 = vsel %vm432, %v1043, %v2426
        %v2496 = vsel %vm432, %v1046, %v2428
        %v2497 = vsel %vm432, %v1051, %v2430
        %v2498 = vsel %vm432, %v1054, %v2432
        %v2499 = vsel %vm432, %v1059, %v2434
        %v2500 = vsel %vm432, %v1062, %v2436
        %v2501 = vld [vmem:[%s5] sm:$0x1]
        %v2503 = vlaneseq
        %v2504 = vshrl.u32 %v2503, 7
        %v2505 = vsub.s32 0, %v2504
        %v2506 = vrot.slane %v2501, %v2505
        %v2508 = vadd.f32 %v2469, %v2506
        %v2509 = vadd.f32 %v2470, %v2506
        %v2510 = vadd.f32 %v2471, %v2506
        %v2511 = vadd.f32 %v2472, %v2506
        %v2512 = vadd.f32 %v2473, %v2506
        %v2513 = vadd.f32 %v2474, %v2506
        %v2514 = vadd.f32 %v2475, %v2506
        %v2515 = vadd.f32 %v2476, %v2506
        %v2516 = vadd.f32 %v2477, %v2506
        %v2517 = vadd.f32 %v2478, %v2506
        %v2518 = vadd.f32 %v2479, %v2506
        %v2519 = vadd.f32 %v2480, %v2506
        %v2520 = vadd.f32 %v2481, %v2506
        %v2521 = vadd.f32 %v2482, %v2506
        %v2522 = vadd.f32 %v2483, %v2506
        %v2523 = vadd.f32 %v2484, %v2506
        %v2524 = vadd.f32 %v2485, %v2506
        %v2525 = vadd.f32 %v2486, %v2506
        %v2526 = vadd.f32 %v2487, %v2506
        %v2527 = vadd.f32 %v2488, %v2506
        %v2528 = vadd.f32 %v2489, %v2506
        %v2529 = vadd.f32 %v2490, %v2506
        %v2530 = vadd.f32 %v2491, %v2506
        %v2531 = vadd.f32 %v2492, %v2506
        %v2532 = vadd.f32 %v2493, %v2506
        %v2533 = vadd.f32 %v2494, %v2506
        %v2534 = vadd.f32 %v2495, %v2506
        %v2535 = vadd.f32 %v2496, %v2506
        %v2536 = vadd.f32 %v2497, %v2506
        %v2537 = vadd.f32 %v2498, %v2506
        %v2538 = vadd.f32 %v2499, %v2506
        %v2539 = vadd.f32 %v2500, %v2506
        %v2540 = vmax.f32 %v2508, 0.0
        %v2541 = vmax.f32 %v2509, 0.0
        %v2542 = vmax.f32 %v2510, 0.0
        %v2543 = vmax.f32 %v2511, 0.0
        %v2544 = vmax.f32 %v2512, 0.0
        %v2545 = vmax.f32 %v2513, 0.0
        %v2546 = vmax.f32 %v2514, 0.0
        %v2547 = vmax.f32 %v2515, 0.0
        %v2548 = vmax.f32 %v2516, 0.0
        %v2549 = vmax.f32 %v2517, 0.0
        %v2550 = vmax.f32 %v2518, 0.0
        %v2551 = vmax.f32 %v2519, 0.0
        %v2552 = vmax.f32 %v2520, 0.0
        %v2553 = vmax.f32 %v2521, 0.0
        %v2554 = vmax.f32 %v2522, 0.0
        %v2555 = vmax.f32 %v2523, 0.0
        %v2556 = vmax.f32 %v2524, 0.0
        %v2557 = vmax.f32 %v2525, 0.0
        %v2558 = vmax.f32 %v2526, 0.0
        %v2559 = vmax.f32 %v2527, 0.0
        %v2560 = vmax.f32 %v2528, 0.0
        %v2561 = vmax.f32 %v2529, 0.0
        %v2562 = vmax.f32 %v2530, 0.0
        %v2563 = vmax.f32 %v2531, 0.0
        %v2564 = vmax.f32 %v2532, 0.0
        %v2565 = vmax.f32 %v2533, 0.0
        %v2566 = vmax.f32 %v2534, 0.0
        %v2567 = vmax.f32 %v2535, 0.0
        %v2568 = vmax.f32 %v2536, 0.0
        %v2569 = vmax.f32 %v2537, 0.0
        %v2570 = vmax.f32 %v2538, 0.0
        %v2571 = vmax.f32 %v2539, 0.0
        %v2572 = vpack.c.bf16 %v2541, %v2540
        %v2573 = vpack.c.bf16 %v2543, %v2542
        %v2574 = vpack.c.bf16 %v2545, %v2544
        %v2575 = vpack.c.bf16 %v2547, %v2546
        %v2576 = vpack.c.bf16 %v2549, %v2548
        %v2577 = vpack.c.bf16 %v2551, %v2550
        %v2578 = vpack.c.bf16 %v2553, %v2552
        %v2579 = vpack.c.bf16 %v2555, %v2554
        %v2580 = vpack.c.bf16 %v2557, %v2556
        %v2581 = vpack.c.bf16 %v2559, %v2558
        %v2582 = vpack.c.bf16 %v2561, %v2560
        %v2583 = vpack.c.bf16 %v2563, %v2562
        %v2584 = vpack.c.bf16 %v2565, %v2564
        %v2585 = vpack.c.bf16 %v2567, %v2566
        %v2586 = vpack.c.bf16 %v2569, %v2568
        %v2587 = vpack.c.bf16 %v2571, %v2570
        %v2604 = vunpack.c.l.b16 %v2572
        %v2605 = vunpack.c.h.b16 %v2572
        %v2606 = vunpack.c.l.b16 %v2573
        %v2607 = vunpack.c.h.b16 %v2573
        %v2608 = vunpack.c.l.b16 %v2574
        %v2609 = vunpack.c.h.b16 %v2574
        %v2610 = vunpack.c.l.b16 %v2575
        %v2611 = vunpack.c.h.b16 %v2575
        %v2612 = vunpack.c.l.b16 %v2576
        %v2613 = vunpack.c.h.b16 %v2576
        %v2614 = vunpack.c.l.b16 %v2577
        %v2615 = vunpack.c.h.b16 %v2577
        %v2616 = vunpack.c.l.b16 %v2578
        %v2617 = vunpack.c.h.b16 %v2578
        %v2618 = vunpack.c.l.b16 %v2579
        %v2619 = vunpack.c.h.b16 %v2579
        %v2620 = vunpack.c.l.b16 %v2580
        %v2621 = vunpack.c.h.b16 %v2580
        %v2622 = vunpack.c.l.b16 %v2581
        %v2623 = vunpack.c.h.b16 %v2581
        %v2624 = vunpack.c.l.b16 %v2582
        %v2625 = vunpack.c.h.b16 %v2582
        %v2626 = vunpack.c.l.b16 %v2583
        %v2627 = vunpack.c.h.b16 %v2583
        %v2628 = vunpack.c.l.b16 %v2584
        %v2629 = vunpack.c.h.b16 %v2584
        %v2630 = vunpack.c.l.b16 %v2585
        %v2631 = vunpack.c.h.b16 %v2585
        %v2632 = vunpack.c.l.b16 %v2586
        %v2633 = vunpack.c.h.b16 %v2586
        %v2634 = vunpack.c.l.b16 %v2587
        %v2635 = vunpack.c.h.b16 %v2587
        %v2636 = vpack.c.b16 %v2604, %v2604
        %v2637 = vpack.c.b16 %v2605, %v2605
        %v2638 = vpack.c.b16 %v2606, %v2606
        %v2639 = vpack.c.b16 %v2607, %v2607
        %v2640 = vpack.c.b16 %v2608, %v2608
        %v2641 = vpack.c.b16 %v2609, %v2609
        %v2642 = vpack.c.b16 %v2610, %v2610
        %v2643 = vpack.c.b16 %v2611, %v2611
        %v2644 = vpack.c.b16 %v2612, %v2612
        %v2645 = vpack.c.b16 %v2613, %v2613
        %v2646 = vpack.c.b16 %v2614, %v2614
        %v2647 = vpack.c.b16 %v2615, %v2615
        %v2648 = vpack.c.b16 %v2616, %v2616
        %v2649 = vpack.c.b16 %v2617, %v2617
        %v2650 = vpack.c.b16 %v2618, %v2618
        %v2651 = vpack.c.b16 %v2619, %v2619
        %v2652 = vpack.c.b16 %v2620, %v2620
        %v2653 = vpack.c.b16 %v2621, %v2621
        %v2654 = vpack.c.b16 %v2622, %v2622
        %v2655 = vpack.c.b16 %v2623, %v2623
        %v2656 = vpack.c.b16 %v2624, %v2624
        %v2657 = vpack.c.b16 %v2625, %v2625
        %v2658 = vpack.c.b16 %v2626, %v2626
        %v2659 = vpack.c.b16 %v2627, %v2627
        %v2660 = vpack.c.b16 %v2628, %v2628
        %v2661 = vpack.c.b16 %v2629, %v2629
        %v2662 = vpack.c.b16 %v2630, %v2630
        %v2663 = vpack.c.b16 %v2631, %v2631
        %v2664 = vpack.c.b16 %v2632, %v2632
        %v2665 = vpack.c.b16 %v2633, %v2633
        %v2666 = vpack.c.b16 %v2634, %v2634
        %v2667 = vpack.c.b16 %v2635, %v2635
        %vm2700 = vcmask 60416
        %2701 = vst.msk [vmem:[%s257] sm:$0xf] %vm2700, %v2636
        %2702 = vst.msk [vmem:[%s257 + $0x4] sm:$0xf] %vm2700, %v2637
        %2703 = vst.msk [vmem:[%s257 + $0x8] sm:$0xf] %vm2700, %v2638
        %2704 = vst.msk [vmem:[%s257 + $0xc] sm:$0xf] %vm2700, %v2639
        %2705 = vst.msk [vmem:[%s257 + $0x10] sm:$0xf] %vm2700, %v2640
        %2706 = vst.msk [vmem:[%s257 + $0x14] sm:$0xf] %vm2700, %v2641
        %2707 = vst.msk [vmem:[%s257 + $0x18] sm:$0xf] %vm2700, %v2642
        %2708 = vst.msk [vmem:[%s257 + $0x1c] sm:$0xf] %vm2700, %v2643
        %2709 = vst.msk [vmem:[%s257 + $0x20] sm:$0xf] %vm2700, %v2644
        %2710 = vst.msk [vmem:[%s257 + $0x24] sm:$0xf] %vm2700, %v2645
        %2711 = vst.msk [vmem:[%s257 + $0x28] sm:$0xf] %vm2700, %v2646
        %2712 = vst.msk [vmem:[%s257 + $0x2c] sm:$0xf] %vm2700, %v2647
        %2713 = vst.msk [vmem:[%s257 + $0x30] sm:$0xf] %vm2700, %v2648
        %2714 = vst.msk [vmem:[%s257 + $0x34] sm:$0xf] %vm2700, %v2649
        %2715 = vst.msk [vmem:[%s257 + $0x38] sm:$0xf] %vm2700, %v2650
        %2716 = vst.msk [vmem:[%s257 + $0x3c] sm:$0xf] %vm2700, %v2651
        %2717 = vst.msk [vmem:[%s257 + $0x40] sm:$0xf] %vm2700, %v2652
        %2718 = vst.msk [vmem:[%s257 + $0x44] sm:$0xf] %vm2700, %v2653
        %2719 = vst.msk [vmem:[%s257 + $0x48] sm:$0xf] %vm2700, %v2654
        %2720 = vst.msk [vmem:[%s257 + $0x4c] sm:$0xf] %vm2700, %v2655
        %2721 = vst.msk [vmem:[%s257 + $0x50] sm:$0xf] %vm2700, %v2656
        %2722 = vst.msk [vmem:[%s257 + $0x54] sm:$0xf] %vm2700, %v2657
        %2723 = vst.msk [vmem:[%s257 + $0x58] sm:$0xf] %vm2700, %v2658
        %2724 = vst.msk [vmem:[%s257 + $0x5c] sm:$0xf] %vm2700, %v2659
        %2725 = vst.msk [vmem:[%s257 + $0x60] sm:$0xf] %vm2700, %v2660
        %2726 = vst.msk [vmem:[%s257 + $0x64] sm:$0xf] %vm2700, %v2661
        %2727 = vst.msk [vmem:[%s257 + $0x68] sm:$0xf] %vm2700, %v2662
        %2728 = vst.msk [vmem:[%s257 + $0x6c] sm:$0xf] %vm2700, %v2663
        %2729 = vst.msk [vmem:[%s257 + $0x70] sm:$0xf] %vm2700, %v2664
        %2730 = vst.msk [vmem:[%s257 + $0x74] sm:$0xf] %vm2700, %v2665
        %2731 = vst.msk [vmem:[%s257 + $0x78] sm:$0xf] %vm2700, %v2666
        %2732 = vst.msk [vmem:[%s257 + $0x7c] sm:$0xf] %vm2700, %v2667
        %s2733 = sand.u32 %s170, 1
        %s2734 = sand.u32 %s170, 1
        %s2735 = smul.addr %s2734, 128
        %s2736 = scalar_lea.vmem [#allocation2], %s2735
        // Predicated region
        $region45: #{fire_forward.1} parent=43 // pred_check
          %p2737 = pneg %p180
        $region46: #{fire_forward.1} parent=43 // pred_check_branch
          %2739 = sbr.rel (%p2737) target = $region48
        $region47: #{fire_forward.1} parent=43 // pred_region
          %s2740 = smul.u32 2, %s21
          %s2741 = smul.u32 8, %s22
          %s2742 = smul.addr %s2741, 2
          %s2743 = smul.addr %s2740, 32
          %s2744 = sadd.s32 %s2742, %s2743
          %s2745 = smul.addr %s2744, 4
          %s2746 = scalar_lea.vmem %s6, %s2745
          // Predicated region
          $region49: #{fire_forward.1} parent=47 // pred_check
            _
          $region50: #{fire_forward.1} parent=47 // pred_check_branch
            %2748 = sbr.rel (0) target = $region52
          $region51: #{fire_forward.1} parent=47 // pred_region
            // Predicated region
            $region53: #{fire_forward.1} parent=51 // pred_check
              _
            $region54: #{fire_forward.1} parent=51 // pred_check_branch
              %2750 = sbr.rel target = $region56
            $region55: #{fire_forward.1} parent=51 // pred_region
              // Predicated region
              $region68: #{fire_forward.1} parent=55 // pred_check
                _
              $region69: #{fire_forward.1} parent=55 // pred_check_branch
                %2827 = sbr.rel (0) target = $region71
              $region70: #{fire_forward.1} parent=55 // pred_region
                loop: start=0, step=1, limit=1
                $region72: #{fire_forward.1} parent=70 // loop_pre_header
                  _
                $region73: #{fire_forward.1} parent=70 // loop_header
                  %s2829 = sphi 0, %s2833
                  %p2830 = scmp.ge.s32.totalorder %s2829, 1
                  %s2834 = sphi %s2736, %s2736
                  %s2835 = sphi %s2746, %s2746
                $region74: #{fire_forward.1} parent=70 // loop_header_branch
                  %2832 = sbr.rel (%p2830) target = $region78
                $region75: #{fire_forward.1} parent=70 // loop_body
                  _
                $region76: #{fire_forward.1} parent=70 // loop_footer
                  %s2833 = sadd.s32 1, %s2829
                $region77: #{fire_forward.1} parent=70 // loop_footer_branch
                  %2828 = sbr.rel target = $region73
                $region78: #{fire_forward.1} parent=70 // loop_exit
                  _
                loop: start=0, step=1, limit=1
                $region79: #{fire_forward.1} parent=70 // loop_pre_header
                  _
                $region80: #{fire_forward.1} parent=70 // loop_header
                  %s2838 = sphi 0, %s2842
                  %p2839 = scmp.ge.s32.totalorder %s2838, 1
                  %s2843 = sphi %s2736, %s2736
                  %s2844 = sphi %s2746, %s2746
                $region81: #{fire_forward.1} parent=70 // loop_header_branch
                  %2841 = sbr.rel (%p2839) target = $region85
                $region82: #{fire_forward.1} parent=70 // loop_body
                  %v2845 = vld [vmem:[%s2843] sm:$0xf]
                  %2846 = vst [vmem:[%s2844] sm:$0xf] %v2845
                  %v2847 = vld [vmem:[%s2843 + $0x4] sm:$0xf]
                  %2848 = vst [vmem:[%s2844 + $0x4] sm:$0xf] %v2847
                  %v2849 = vld [vmem:[%s2843 + $0x8] sm:$0xf]
                  %2850 = vst [vmem:[%s2844 + $0x8] sm:$0xf] %v2849
                  %v2851 = vld [vmem:[%s2843 + $0xc] sm:$0xf]
                  %2852 = vst [vmem:[%s2844 + $0xc] sm:$0xf] %v2851
                  %v2853 = vld [vmem:[%s2843 + $0x10] sm:$0xf]
                  %2854 = vst [vmem:[%s2844 + $0x10] sm:$0xf] %v2853
                  %v2855 = vld [vmem:[%s2843 + $0x14] sm:$0xf]
                  %2856 = vst [vmem:[%s2844 + $0x14] sm:$0xf] %v2855
                  %v2857 = vld [vmem:[%s2843 + $0x18] sm:$0xf]
                  %2858 = vst [vmem:[%s2844 + $0x18] sm:$0xf] %v2857
                  %v2859 = vld [vmem:[%s2843 + $0x1c] sm:$0xf]
                  %2860 = vst [vmem:[%s2844 + $0x1c] sm:$0xf] %v2859
                  %v2861 = vld [vmem:[%s2843 + $0x20] sm:$0xf]
                  %2862 = vst [vmem:[%s2844 + $0x20] sm:$0xf] %v2861
                  %v2863 = vld [vmem:[%s2843 + $0x24] sm:$0xf]
                  %2864 = vst [vmem:[%s2844 + $0x24] sm:$0xf] %v2863
                  %v2865 = vld [vmem:[%s2843 + $0x28] sm:$0xf]
                  %2866 = vst [vmem:[%s2844 + $0x28] sm:$0xf] %v2865
                  %v2867 = vld [vmem:[%s2843 + $0x2c] sm:$0xf]
                  %2868 = vst [vmem:[%s2844 + $0x2c] sm:$0xf] %v2867
                  %v2869 = vld [vmem:[%s2843 + $0x30] sm:$0xf]
                  %2870 = vst [vmem:[%s2844 + $0x30] sm:$0xf] %v2869
                  %v2871 = vld [vmem:[%s2843 + $0x34] sm:$0xf]
                  %2872 = vst [vmem:[%s2844 + $0x34] sm:$0xf] %v2871
                  %v2873 = vld [vmem:[%s2843 + $0x38] sm:$0xf]
                  %2874 = vst [vmem:[%s2844 + $0x38] sm:$0xf] %v2873
                  %v2875 = vld [vmem:[%s2843 + $0x3c] sm:$0xf]
                  %2876 = vst [vmem:[%s2844 + $0x3c] sm:$0xf] %v2875
                  %v2877 = vld [vmem:[%s2843 + $0x40] sm:$0xf]
                  %2878 = vst [vmem:[%s2844 + $0x80] sm:$0xf] %v2877
                  %v2879 = vld [vmem:[%s2843 + $0x44] sm:$0xf]
                  %2880 = vst [vmem:[%s2844 + $0x84] sm:$0xf] %v2879
                  %v2881 = vld [vmem:[%s2843 + $0x48] sm:$0xf]
                  %2882 = vst [vmem:[%s2844 + $0x88] sm:$0xf] %v2881
                  %v2883 = vld [vmem:[%s2843 + $0x4c] sm:$0xf]
                  %2884 = vst [vmem:[%s2844 + $0x8c] sm:$0xf] %v2883
                  %v2885 = vld [vmem:[%s2843 + $0x50] sm:$0xf]
                  %2886 = vst [vmem:[%s2844 + $0x90] sm:$0xf] %v2885
                  %v2887 = vld [vmem:[%s2843 + $0x54] sm:$0xf]
                  %2888 = vst [vmem:[%s2844 + $0x94] sm:$0xf] %v2887
                  %v2889 = vld [vmem:[%s2843 + $0x58] sm:$0xf]
                  %2890 = vst [vmem:[%s2844 + $0x98] sm:$0xf] %v2889
                  %v2891 = vld [vmem:[%s2843 + $0x5c] sm:$0xf]
                  %2892 = vst [vmem:[%s2844 + $0x9c] sm:$0xf] %v2891
                  %v2893 = vld [vmem:[%s2843 + $0x60] sm:$0xf]
                  %2894 = vst [vmem:[%s2844 + $0xa0] sm:$0xf] %v2893
                  %v2895 = vld [vmem:[%s2843 + $0x64] sm:$0xf]
                  %2896 = vst [vmem:[%s2844 + $0xa4] sm:$0xf] %v2895
                  %v2897 = vld [vmem:[%s2843 + $0x68] sm:$0xf]
                  %2898 = vst [vmem:[%s2844 + $0xa8] sm:$0xf] %v2897
                  %v2899 = vld [vmem:[%s2843 + $0x6c] sm:$0xf]
                  %2900 = vst [vmem:[%s2844 + $0xac] sm:$0xf] %v2899
                  %v2901 = vld [vmem:[%s2843 + $0x70] sm:$0xf]
                  %2902 = vst [vmem:[%s2844 + $0xb0] sm:$0xf] %v2901
                  %v2903 = vld [vmem:[%s2843 + $0x74] sm:$0xf]
                  %2904 = vst [vmem:[%s2844 + $0xb4] sm:$0xf] %v2903
                  %v2905 = vld [vmem:[%s2843 + $0x78] sm:$0xf]
                  %2906 = vst [vmem:[%s2844 + $0xb8] sm:$0xf] %v2905
                  %v2907 = vld [vmem:[%s2843 + $0x7c] sm:$0xf]
                  %2908 = vst [vmem:[%s2844 + $0xbc] sm:$0xf] %v2907
                $region83: #{fire_forward.1} parent=70 // loop_footer
                  %s2842 = sadd.s32 1, %s2838
                $region84: #{fire_forward.1} parent=70 // loop_footer_branch
                  %2837 = sbr.rel target = $region80
                $region85: #{fire_forward.1} parent=70 // loop_exit
                  _
              $region71: #{fire_forward.1} parent=55 // pred_fallthru
                _
            $region56: #{fire_forward.1} parent=51 // pred_fallthru
              _
            // Predicated region
            $region57: #{fire_forward.1} parent=51 // pred_check
              _
            $region58: #{fire_forward.1} parent=51 // pred_check_branch
              %2752 = sbr.rel (0) target = $region60
            $region59: #{fire_forward.1} parent=51 // pred_region
              loop: start=0, step=1, limit=1
              $region61: #{fire_forward.1} parent=59 // loop_pre_header
                _
              $region62: #{fire_forward.1} parent=59 // loop_header
                %s2755 = sphi 0, %s2759
                %p2756 = scmp.ge.s32.totalorder %s2755, 1
                %s2760 = sphi %s2736, %s2736
                %s2761 = sphi %s2746, %s2746
              $region63: #{fire_forward.1} parent=59 // loop_header_branch
                %2758 = sbr.rel (%p2756) target = $region67
              $region64: #{fire_forward.1} parent=59 // loop_body
                %v2762 = vld [vmem:[%s2760] sm:$0xf]
                %2763 = vst [vmem:[%s2761] sm:$0xf] %v2762
                %v2764 = vld [vmem:[%s2760 + $0x4] sm:$0xf]
                %2765 = vst [vmem:[%s2761 + $0x4] sm:$0xf] %v2764
                %v2766 = vld [vmem:[%s2760 + $0x8] sm:$0xf]
                %2767 = vst [vmem:[%s2761 + $0x8] sm:$0xf] %v2766
                %v2768 = vld [vmem:[%s2760 + $0xc] sm:$0xf]
                %2769 = vst [vmem:[%s2761 + $0xc] sm:$0xf] %v2768
                %v2770 = vld [vmem:[%s2760 + $0x10] sm:$0xf]
                %2771 = vst [vmem:[%s2761 + $0x10] sm:$0xf] %v2770
                %v2772 = vld [vmem:[%s2760 + $0x14] sm:$0xf]
                %2773 = vst [vmem:[%s2761 + $0x14] sm:$0xf] %v2772
                %v2774 = vld [vmem:[%s2760 + $0x18] sm:$0xf]
                %2775 = vst [vmem:[%s2761 + $0x18] sm:$0xf] %v2774
                %v2776 = vld [vmem:[%s2760 + $0x1c] sm:$0xf]
                %2777 = vst [vmem:[%s2761 + $0x1c] sm:$0xf] %v2776
                %v2778 = vld [vmem:[%s2760 + $0x20] sm:$0xf]
                %2779 = vst [vmem:[%s2761 + $0x20] sm:$0xf] %v2778
                %v2780 = vld [vmem:[%s2760 + $0x24] sm:$0xf]
                %2781 = vst [vmem:[%s2761 + $0x24] sm:$0xf] %v2780
                %v2782 = vld [vmem:[%s2760 + $0x28] sm:$0xf]
                %2783 = vst [vmem:[%s2761 + $0x28] sm:$0xf] %v2782
                %v2784 = vld [vmem:[%s2760 + $0x2c] sm:$0xf]
                %2785 = vst [vmem:[%s2761 + $0x2c] sm:$0xf] %v2784
                %v2786 = vld [vmem:[%s2760 + $0x30] sm:$0xf]
                %2787 = vst [vmem:[%s2761 + $0x30] sm:$0xf] %v2786
                %v2788 = vld [vmem:[%s2760 + $0x34] sm:$0xf]
                %2789 = vst [vmem:[%s2761 + $0x34] sm:$0xf] %v2788
                %v2790 = vld [vmem:[%s2760 + $0x38] sm:$0xf]
                %2791 = vst [vmem:[%s2761 + $0x38] sm:$0xf] %v2790
                %v2792 = vld [vmem:[%s2760 + $0x3c] sm:$0xf]
                %2793 = vst [vmem:[%s2761 + $0x3c] sm:$0xf] %v2792
                %v2794 = vld [vmem:[%s2760 + $0x40] sm:$0xf]
                %2795 = vst [vmem:[%s2761 + $0x80] sm:$0xf] %v2794
                %v2796 = vld [vmem:[%s2760 + $0x44] sm:$0xf]
                %2797 = vst [vmem:[%s2761 + $0x84] sm:$0xf] %v2796
                %v2798 = vld [vmem:[%s2760 + $0x48] sm:$0xf]
                %2799 = vst [vmem:[%s2761 + $0x88] sm:$0xf] %v2798
                %v2800 = vld [vmem:[%s2760 + $0x4c] sm:$0xf]
                %2801 = vst [vmem:[%s2761 + $0x8c] sm:$0xf] %v2800
                %v2802 = vld [vmem:[%s2760 + $0x50] sm:$0xf]
                %2803 = vst [vmem:[%s2761 + $0x90] sm:$0xf] %v2802
                %v2804 = vld [vmem:[%s2760 + $0x54] sm:$0xf]
                %2805 = vst [vmem:[%s2761 + $0x94] sm:$0xf] %v2804
                %v2806 = vld [vmem:[%s2760 + $0x58] sm:$0xf]
                %2807 = vst [vmem:[%s2761 + $0x98] sm:$0xf] %v2806
                %v2808 = vld [vmem:[%s2760 + $0x5c] sm:$0xf]
                %2809 = vst [vmem:[%s2761 + $0x9c] sm:$0xf] %v2808
                %v2810 = vld [vmem:[%s2760 + $0x60] sm:$0xf]
                %2811 = vst [vmem:[%s2761 + $0xa0] sm:$0xf] %v2810
                %v2812 = vld [vmem:[%s2760 + $0x64] sm:$0xf]
                %2813 = vst [vmem:[%s2761 + $0xa4] sm:$0xf] %v2812
                %v2814 = vld [vmem:[%s2760 + $0x68] sm:$0xf]
                %2815 = vst [vmem:[%s2761 + $0xa8] sm:$0xf] %v2814
                %v2816 = vld [vmem:[%s2760 + $0x6c] sm:$0xf]
                %2817 = vst [vmem:[%s2761 + $0xac] sm:$0xf] %v2816
                %v2818 = vld [vmem:[%s2760 + $0x70] sm:$0xf]
                %2819 = vst [vmem:[%s2761 + $0xb0] sm:$0xf] %v2818
                %v2820 = vld [vmem:[%s2760 + $0x74] sm:$0xf]
                %2821 = vst [vmem:[%s2761 + $0xb4] sm:$0xf] %v2820
                %v2822 = vld [vmem:[%s2760 + $0x78] sm:$0xf]
                %2823 = vst [vmem:[%s2761 + $0xb8] sm:$0xf] %v2822
                %v2824 = vld [vmem:[%s2760 + $0x7c] sm:$0xf]
                %2825 = vst [vmem:[%s2761 + $0xbc] sm:$0xf] %v2824
              $region65: #{fire_forward.1} parent=59 // loop_footer
                %s2759 = sadd.s32 1, %s2755
              $region66: #{fire_forward.1} parent=59 // loop_footer_branch
                %2754 = sbr.rel target = $region62
              $region67: #{fire_forward.1} parent=59 // loop_exit
                _
            $region60: #{fire_forward.1} parent=51 // pred_fallthru
              _
          $region52: #{fire_forward.1} parent=47 // pred_fallthru
            _
          %2909 = vnop
        $region48: #{fire_forward.1} parent=43 // pred_fallthru
          _
      $region44: #{fire_forward.1} parent=5 // pred_fallthru
        _
      %p2910 = scmp.le.s32.totalorder 2, %s12
      // Predicated region
      $region86: #{fire_forward.1} parent=5 // pred_check
        %p2911 = pneg %p2910
      $region87: #{fire_forward.1} parent=5 // pred_check_branch
        %2913 = sbr.rel (%p2911) target = $region89
      $region88: #{fire_forward.1} parent=5 // pred_region
        %s2914 = ssub.s32 %s12, 2
        // Predicated region
        $region90: #{fire_forward.1} parent=88 // pred_check
          %p2915 = pneg %p186
        $region91: #{fire_forward.1} parent=88 // pred_check_branch
          %2917 = sbr.rel (%p2915) target = $region93
        $region92: #{fire_forward.1} parent=88 // pred_region
          %s2918 = sand.u32 %s171, 1
          %s2919 = sand.u32 %s171, 1
          %s2920 = smul.addr %s2919, 128
          %s2921 = scalar_lea.vmem [#allocation2], %s2920
        $region93: #{fire_forward.1} parent=88 // pred_fallthru
          _
      $region89: #{fire_forward.1} parent=5 // pred_fallthru
        _
    $region6: #{fire_forward.1} parent=1 // loop_footer
      %s16 = sadd.s32 1, %s12
    $region7: #{fire_forward.1} parent=1 // loop_footer_branch
      %11 = sbr.rel target = $region3
    $region8: #{fire_forward.1} parent=1 // loop_exit
      _

</llo_original>
